<compile_context>
chip_gen: v7x
topology: tpu7x:2x2x1
jax: 0.10.0
libtpu: 0.0.40
codegen_flags: <defaults>
</compile_context>

<pallas_src>
import math

import numpy as np
import jax
import jax.numpy as jnp
from jax.experimental import pallas as pl
from jax.experimental.pallas import tpu as pltpu


# ----------------------------------------------------------------------------
# BlockSpec helpers.
# ----------------------------------------------------------------------------
def _const_spec(shape):
    """Whole array, same block every grid step (fetched once)."""
    nd = len(shape)
    return pl.BlockSpec(shape, lambda l, _nd=nd: (0,) * _nd)


def _layer_spec(shape):
    """One layer slice along the leading (L) axis per grid step."""
    nd = len(shape)
    return pl.BlockSpec((1,) + tuple(shape[1:]),
                        lambda l, _nd=nd: (l,) + (0,) * (_nd - 1))


# ----------------------------------------------------------------------------
# Fused model kernel: grid = (n_layers,), activation carried in out_ref.
# ----------------------------------------------------------------------------
def _make_model_kernel(n_heads):
    H = n_heads
    BMM_NN = (((2,), (1,)), ((0,), (0,)))   # (G,M,K) @ (G,K,N) -> (G,M,N)
    BMM_NT = (((2,), (2,)), ((0,), (0,)))   # (G,M,K) @ (G,N,K) -> (G,M,N)

    def kernel(x_ref, bng_ref, bnb_ref, encw_ref, encb_ref, elng_ref, elnb_ref,
               wqkv_ref, bqkv_ref, wo_ref, bo_ref, ln1g_ref, ln1b_ref,
               w1_ref, b1_ref, w2_ref, b2_ref, ln2g_ref, ln2b_ref,
               out_ref):
        l = pl.program_id(0)
        B, T, F = x_ref.shape
        D = out_ref.shape[-1]
        hd = D // H
        N = B * T
        scale = 1.0 / math.sqrt(hd)

        # ---- layer 0 only: BatchNorm1d (batch stats) + Linear + LayerNorm ---
        @pl.when(l == 0)
        def _():
            xf = x_ref[...].astype(jnp.float32).reshape(N, F)
            mean = jnp.mean(xf, axis=0, keepdims=True)
            var = jnp.mean((xf - mean) ** 2, axis=0, keepdims=True)
            xn = (xf - mean) * jax.lax.rsqrt(var + 1e-5)
            xn = xn * bng_ref[...] + bnb_ref[...]
            y = jnp.dot(xn.astype(jnp.bfloat16), encw_ref[...],
                        preferred_element_type=jnp.float32) + encb_ref[...]
            mu = jnp.mean(y, axis=-1, keepdims=True)
            v_ = jnp.mean((y - mu) ** 2, axis=-1, keepdims=True)
            y = (y - mu) * jax.lax.rsqrt(v_ + 1e-5) * elng_ref[...] + elnb_ref[...]
            out_ref[...] = y.reshape(B, T, D)

        # ---- transformer encoder layer l on the VMEM-resident carry ---------
        x = out_ref[...].reshape(N, D)                        # (B*T, D) f32

        # Fused QKV projection: one lane-dense (N, D) @ (D, 3D) matmul.
        qkv = jnp.dot(x.astype(jnp.bfloat16), wqkv_ref[0],
                      preferred_element_type=jnp.float32) + bqkv_ref[0]
        q = qkv[:, :D] * scale
        k = qkv[:, D:2 * D]
        v = qkv[:, 2 * D:]

        def split_heads(m):            # (N, D) -> (H*B, T, hd), H-major batch
            parts = [m[:, h * hd:(h + 1) * hd].reshape(B, T, hd)
                     for h in range(H)]
            return jnp.concatenate(parts, axis=0)

        qh = split_heads(q).astype(jnp.bfloat16)
        kh = split_heads(k).astype(jnp.bfloat16)
        vh = split_heads(v).astype(jnp.bfloat16)

        # TODO(synk): for long T, switch to a KV-tiled online-softmax loop
        # instead of materializing the (H*B, T, T) score tensor.
        sc = jax.lax.dot_general(qh, kh, BMM_NT,
                                 preferred_element_type=jnp.float32)  # (HB,T,T)
        sc = sc - jnp.max(sc, axis=-1, keepdims=True)
        p = jnp.exp(sc)
        p = p * pl.reciprocal(jnp.sum(p, axis=-1, keepdims=True), approx=True)

        ctx = jax.lax.dot_general(p.astype(jnp.bfloat16), vh, BMM_NN,
                                  preferred_element_type=jnp.float32)  # (HB,T,hd)

        # Merge heads back into the lane dim (head-concat order), then one
        # full-K output projection.
        ctx_parts = [ctx[h * B:(h + 1) * B].reshape(N, hd) for h in range(H)]
        ctx_cat = jnp.concatenate(ctx_parts, axis=-1)                  # (N, D)
        attn = jnp.dot(ctx_cat.astype(jnp.bfloat16), wo_ref[0],
                       preferred_element_type=jnp.float32) + bo_ref[0]

        # ---- residual + LayerNorm 1 (f32) -----------------------------------
        x1 = x + attn
        mu = jnp.mean(x1, axis=-1, keepdims=True)
        var = jnp.mean((x1 - mu) ** 2, axis=-1, keepdims=True)
        x1 = (x1 - mu) * jax.lax.rsqrt(var + 1e-5) * ln1g_ref[0] + ln1b_ref[0]

        # ---- feed-forward (ReLU) + residual + LayerNorm 2 --------------------
        h1 = jnp.maximum(
            jnp.dot(x1.astype(jnp.bfloat16), w1_ref[0],
                    preferred_element_type=jnp.float32) + b1_ref[0], 0.0)
        ff = jnp.dot(h1.astype(jnp.bfloat16), w2_ref[0],
                     preferred_element_type=jnp.float32) + b2_ref[0]
        x2 = x1 + ff
        mu = jnp.mean(x2, axis=-1, keepdims=True)
        var = jnp.mean((x2 - mu) ** 2, axis=-1, keepdims=True)
        x2 = (x2 - mu) * jax.lax.rsqrt(var + 1e-5) * ln2g_ref[0] + ln2b_ref[0]

        # Carry (and the final result after the last layer).
        out_ref[...] = x2.reshape(B, T, D)

    return kernel


def pallas_forward(x_padded, packed, n_heads, n_layers):
    B, T, _ = x_padded.shape
    D = packed['enc_b'].shape[-1]

    enc_args = (x_padded, packed['bn_g'], packed['bn_b'], packed['enc_w'],
                packed['enc_b'], packed['eln_g'], packed['eln_b'])
    layer_keys = ('wqkv', 'bqkv', 'wo', 'bo', 'ln1g', 'ln1b',
                  'w1', 'b1', 'w2', 'b2', 'ln2g', 'ln2b')
    layer_args = tuple(packed[k] for k in layer_keys)

    # TODO(synk): on v7x, split B across a leading "parallel" grid axis (or
    # core_map) so both TensorCores are used; not worthwhile at these shapes.
    return pl.pallas_call(
        _make_model_kernel(n_heads),
        out_shape=jax.ShapeDtypeStruct((B, T, D), jnp.float32),
        grid=(n_layers,),
        in_specs=[_const_spec(a.shape) for a in enc_args]
                 + [_layer_spec(a.shape) for a in layer_args],
        out_specs=_const_spec((B, T, D)),
        compiler_params=pltpu.CompilerParams(
            dimension_semantics=("arbitrary",),
            vmem_limit_bytes=32 * 1024 * 1024),
    )(*enc_args, *layer_args)


# ----------------------------------------------------------------------------
# Parameter init (canonical, PyTorch-like) and one-time packing for the kernel.
# ----------------------------------------------------------------------------
def init_params(key, in_size, n_units, n_layers, dim_ff):
    D = n_units
    p = {}
    k_enc, key = jax.random.split(key)
    p['bn_g'] = jnp.ones((in_size,), jnp.float32)
    p['bn_b'] = jnp.zeros((in_size,), jnp.float32)
    # encoder Linear: weight ~ U(-0.1, 0.1), bias = 0  (module.init_weights)
    p['enc_w_t'] = jax.random.uniform(k_enc, (in_size, D), jnp.float32, -0.1, 0.1)
    p['enc_b'] = jnp.zeros((D,), jnp.float32)
    p['enc_ln_g'] = jnp.ones((D,), jnp.float32)
    p['enc_ln_b'] = jnp.zeros((D,), jnp.float32)

    layers = []
    xb = math.sqrt(6.0 / (4 * D))        # xavier bound for the (3D, D) in_proj
    lb = 1.0 / math.sqrt(D)
    fb = 1.0 / math.sqrt(dim_ff)
    for _ in range(n_layers):
        key, k1, k2, k3, k4, k5, k6 = jax.random.split(key, 7)
        layers.append(dict(
            wqkv_t=jax.random.uniform(k1, (D, 3 * D), jnp.float32, -xb, xb),
            bqkv=jnp.zeros((3 * D,), jnp.float32),
            wo_t=jax.random.uniform(k2, (D, D), jnp.float32, -lb, lb),
            bo=jnp.zeros((D,), jnp.float32),
            ln1_g=jnp.ones((D,), jnp.float32),
            ln1_b=jnp.zeros((D,), jnp.float32),
            w1_t=jax.random.uniform(k3, (D, dim_ff), jnp.float32, -lb, lb),
            b1=jax.random.uniform(k4, (dim_ff,), jnp.float32, -lb, lb),
            w2_t=jax.random.uniform(k5, (dim_ff, D), jnp.float32, -fb, fb),
            b2=jax.random.uniform(k6, (D,), jnp.float32, -fb, fb),
            ln2_g=jnp.ones((D,), jnp.float32),
            ln2_b=jnp.zeros((D,), jnp.float32),
        ))
    p['layers'] = layers
    return p


def pack_params(params):
    """One-time packing: stack layers along L, bf16-cast matmul weights."""
    bf = jnp.bfloat16
    layers = params['layers']
    D = params['enc_b'].shape[0]
    F_in = params['bn_g'].shape[0]
    dim_ff = layers[0]['w1_t'].shape[1]

    def stk_w(name):
        return jnp.stack([lp[name] for lp in layers], axis=0).astype(bf)

    def stk_v(name, width):
        return jnp.stack([lp[name].reshape(1, width) for lp in layers], axis=0)

    return dict(
        bn_g=params['bn_g'].reshape(1, F_in),
        bn_b=params['bn_b'].reshape(1, F_in),
        enc_w=params['enc_w_t'].astype(bf),
        enc_b=params['enc_b'].reshape(1, D),
        eln_g=params['enc_ln_g'].reshape(1, D),
        eln_b=params['enc_ln_b'].reshape(1, D),
        wqkv=stk_w('wqkv_t'),            # (L, D, 3D)  q|k|v cols, head-major
        bqkv=stk_v('bqkv', 3 * D),       # (L, 1, 3D)
        wo=stk_w('wo_t'),                # (L, D, D)   rows in head-concat order
        bo=stk_v('bo', D),
        ln1g=stk_v('ln1_g', D), ln1b=stk_v('ln1_b', D),
        w1=stk_w('w1_t'), b1=stk_v('b1', dim_ff),
        w2=stk_w('w2_t'), b2=stk_v('b2', D),
        ln2g=stk_v('ln2_g', D), ln2b=stk_v('ln2_b', D),
    )


# ----------------------------------------------------------------------------
# Forward-pass glue (padding only; hot path is a single Pallas call).
# ----------------------------------------------------------------------------
def pad_sequence(src_list, pad_value=-1.0):
    T = max(int(s.shape[0]) for s in src_list)
    F = int(src_list[0].shape[1])
    rows = []
    for s in src_list:
        pad = T - int(s.shape[0])
        if pad:
            s = jnp.concatenate([s, jnp.full((pad, F), pad_value, s.dtype)], 0)
        rows.append(s)
    return jnp.stack(rows, axis=0)  # (B, T, F)


def masked_transformer_forward(src_list, packed, n_heads, n_layers):
    # TODO(synk): has_mask (causal src_mask) and has_pos (PositionalEncoding)
    # branches are not implemented (module defaults are False).
    x = pad_sequence(src_list, -1.0)                         # (B, T, in_size)
    return pallas_forward(x, packed, n_heads, n_layers)


# ----------------------------------------------------------------------------
# Pure-JAX reference (mirrors the kernel's bf16-at-the-MXU casts so the
# comparison isolates kernel bugs; a pure-f32 reference agrees to ~1e-2).
# ----------------------------------------------------------------------------
def _mm(a, b, subs):
    return jnp.einsum(subs, a.astype(jnp.bfloat16), b.astype(jnp.bfloat16),
                      preferred_element_type=jnp.float32)


def _ln(x, g, b):
    mu = jnp.mean(x, axis=-1, keepdims=True)
    var = jnp.mean((x - mu) ** 2, axis=-1, keepdims=True)
    return (x - mu) / jnp.sqrt(var + 1e-5) * g + b


def _ref_layer(x, lp, H):
    B, T, D = x.shape
    hd = D // H
    qkv = _mm(x, lp['wqkv_t'], 'btd,de->bte') + lp['bqkv']
    q, k, v = qkv[..., :D], qkv[..., D:2 * D], qkv[..., 2 * D:]
    q = q.reshape(B, T, H, hd) * (1.0 / math.sqrt(hd))
    k = k.reshape(B, T, H, hd)
    v = v.reshape(B, T, H, hd)
    sc = _mm(q, k, 'bqhd,bkhd->bhqk')
    p = jax.nn.softmax(sc, axis=-1)
    ctx = _mm(p, v, 'bhqk,bkhd->bqhd').reshape(B, T, D)
    attn = _mm(ctx, lp['wo_t'], 'btd,de->bte') + lp['bo']
    x1 = _ln(x + attn, lp['ln1_g'], lp['ln1_b'])
    h1 = jnp.maximum(_mm(x1, lp['w1_t'], 'btd,df->btf') + lp['b1'], 0.0)
    ff = _mm(h1, lp['w2_t'], 'btf,fd->btd') + lp['b2']
    return _ln(x1 + ff, lp['ln2_g'], lp['ln2_b'])


def reference_forward(src_list, params, n_heads):
    x = pad_sequence(src_list, -1.0)
    F_in = x.shape[-1]
    flat = x.reshape(-1, F_in)
    mean = jnp.mean(flat, axis=0)
    var = jnp.mean((flat - mean) ** 2, axis=0)
    xn = (x - mean) / jnp.sqrt(var + 1e-5) * params['bn_g'] + params['bn_b']
    y = _mm(xn, params['enc_w_t'], 'btf,fd->btd') + params['enc_b']
    y = _ln(y, params['enc_ln_g'], params['enc_ln_b'])
    for lp in params['layers']:
        y = _ref_layer(y, lp, n_heads)
    return y


# ----------------------------------------------------------------------------
if __name__ == "__main__":
    in_size, n_heads, n_units, n_layers, dim_ff = 16, 4, 32, 2, 64

    key = jax.random.PRNGKey(0)
    k_p, k_x1, k_x2 = jax.random.split(key, 3)
    params = init_params(k_p, in_size, n_units, n_layers, dim_ff)
    packed = pack_params(params)        # hoisted out of the forward (init-time)

    # Variable-length input list (as the PyTorch forward expects); padded to T=8.
    src = [jax.random.normal(k_x1, (8, in_size), jnp.float32),
           jax.random.normal(k_x2, (6, in_size), jnp.float32)]

    out = jax.block_until_ready(
        masked_transformer_forward(src, packed, n_heads, n_layers))
    ref = jax.block_until_ready(reference_forward(src, params, n_heads))
    np.testing.assert_allclose(np.asarray(out), np.asarray(ref),
                               rtol=2e-2, atol=2e-2)

    # TODO(synk): dropout is identity; BatchNorm running stats are not updated
    # (batch statistics are used for normalization, matching the reference).
    print("KERNEL_OK")
</pallas_src>

<mosaic_0001>
module attributes {stable_mosaic.version = 11 : i64} {
  func.func @kernel(%arg0: i32, %arg1: memref<2x8x16xf32, #tpu.memory_space<vmem>>, %arg2: memref<1x16xf32, #tpu.memory_space<vmem>>, %arg3: memref<1x16xf32, #tpu.memory_space<vmem>>, %arg4: memref<16x32xbf16, #tpu.memory_space<vmem>>, %arg5: memref<1x32xf32, #tpu.memory_space<vmem>>, %arg6: memref<1x32xf32, #tpu.memory_space<vmem>>, %arg7: memref<1x32xf32, #tpu.memory_space<vmem>>, %arg8: memref<1x32x96xbf16, #tpu.memory_space<vmem>>, %arg9: memref<1x1x96xf32, #tpu.memory_space<vmem>>, %arg10: memref<1x32x32xbf16, #tpu.memory_space<vmem>>, %arg11: memref<1x1x32xf32, #tpu.memory_space<vmem>>, %arg12: memref<1x1x32xf32, #tpu.memory_space<vmem>>, %arg13: memref<1x1x32xf32, #tpu.memory_space<vmem>>, %arg14: memref<1x32x64xbf16, #tpu.memory_space<vmem>>, %arg15: memref<1x1x64xf32, #tpu.memory_space<vmem>>, %arg16: memref<1x64x32xbf16, #tpu.memory_space<vmem>>, %arg17: memref<1x1x32xf32, #tpu.memory_space<vmem>>, %arg18: memref<1x1x32xf32, #tpu.memory_space<vmem>>, %arg19: memref<1x1x32xf32, #tpu.memory_space<vmem>>, %arg20: memref<2x8x32xf32, #tpu.memory_space<vmem>>) attributes {dimension_semantics = [#tpu.dimension_semantics<arbitrary>], iteration_bounds = array<i64: 2>, scalar_prefetch = 0 : i64, scratch_operands = 0 : i64, tpu.core_type = #tpu.core_type<tc>, window_params = [{pipeline_mode = #tpu.pipeline_mode<synchronous>, transform_indices = @transform_0, window_bounds = array<i64: 2, 8, 16>}, {pipeline_mode = #tpu.pipeline_mode<synchronous>, transform_indices = @transform_1, window_bounds = array<i64: 1, 16>}, {pipeline_mode = #tpu.pipeline_mode<synchronous>, transform_indices = @transform_2, window_bounds = array<i64: 1, 16>}, {pipeline_mode = #tpu.pipeline_mode<synchronous>, transform_indices = @transform_3, window_bounds = array<i64: 16, 32>}, {pipeline_mode = #tpu.pipeline_mode<synchronous>, transform_indices = @transform_4, window_bounds = array<i64: 1, 32>}, {pipeline_mode = #tpu.pipeline_mode<synchronous>, transform_indices = @transform_5, window_bounds = array<i64: 1, 32>}, {pipeline_mode = #tpu.pipeline_mode<synchronous>, transform_indices = @transform_6, window_bounds = array<i64: 1, 32>}, {transform_indices = @transform_7, window_bounds = array<i64: 1, 32, 96>}, {transform_indices = @transform_8, window_bounds = array<i64: 1, 1, 96>}, {transform_indices = @transform_9, window_bounds = array<i64: 1, 32, 32>}, {transform_indices = @transform_10, window_bounds = array<i64: 1, 1, 32>}, {transform_indices = @transform_11, window_bounds = array<i64: 1, 1, 32>}, {transform_indices = @transform_12, window_bounds = array<i64: 1, 1, 32>}, {transform_indices = @transform_13, window_bounds = array<i64: 1, 32, 64>}, {transform_indices = @transform_14, window_bounds = array<i64: 1, 1, 64>}, {transform_indices = @transform_15, window_bounds = array<i64: 1, 64, 32>}, {transform_indices = @transform_16, window_bounds = array<i64: 1, 1, 32>}, {transform_indices = @transform_17, window_bounds = array<i64: 1, 1, 32>}, {transform_indices = @transform_18, window_bounds = array<i64: 1, 1, 32>}, {pipeline_mode = #tpu.pipeline_mode<synchronous>, transform_indices = @transform_19, window_bounds = array<i64: 2, 8, 32>}]} {
    %c0_i32 = arith.constant 0 : i32
    %0 = arith.cmpi eq, %arg0, %c0_i32 : i32
    %1 = arith.extui %0 : i1 to i32
    %c0_i32_0 = arith.constant 0 : i32
    %2 = arith.cmpi ne, %1, %c0_i32_0 : i32
    scf.if %2 {
      %c0_61 = arith.constant 0 : index
      %c0_62 = arith.constant 0 : index
      %c0_63 = arith.constant 0 : index
      %152 = vector.load %arg1[%c0_61, %c0_62, %c0_63] : memref<2x8x16xf32, #tpu.memory_space<vmem>>, vector<2x8x16xf32>
      %153 = vector.shape_cast %152 : vector<2x8x16xf32> to vector<16x16xf32>
      %cst_64 = arith.constant dense<0.000000e+00> : vector<16xf32>
      %154 = vector.multi_reduction <add>, %153, %cst_64 [0] : vector<16x16xf32> to vector<16xf32>
      %155 = vector.shape_cast %154 : vector<16xf32> to vector<1x16xf32>
      %cst_65 = arith.constant 1.600000e+01 : f32
      %156 = vector.broadcast %cst_65 : f32 to vector<1x16xf32>
      %157 = arith.divf %155, %156 : vector<1x16xf32>
      %158 = vector.broadcast %157 : vector<1x16xf32> to vector<16x16xf32>
      %159 = arith.subf %153, %158 : vector<16x16xf32>
      %160 = arith.mulf %159, %159 : vector<16x16xf32>
      %cst_66 = arith.constant dense<0.000000e+00> : vector<16xf32>
      %161 = vector.multi_reduction <add>, %160, %cst_66 [0] : vector<16x16xf32> to vector<16xf32>
      %162 = vector.shape_cast %161 : vector<16xf32> to vector<1x16xf32>
      %cst_67 = arith.constant 1.600000e+01 : f32
      %163 = vector.broadcast %cst_67 : f32 to vector<1x16xf32>
      %164 = arith.divf %162, %163 : vector<1x16xf32>
      %165 = vector.broadcast %157 : vector<1x16xf32> to vector<16x16xf32>
      %166 = arith.subf %153, %165 : vector<16x16xf32>
      %cst_68 = arith.constant 9.99999974E-6 : f32
      %167 = vector.broadcast %cst_68 : f32 to vector<1x16xf32>
      %168 = arith.addf %164, %167 : vector<1x16xf32>
      %169 = math.rsqrt %168 : vector<1x16xf32>
      %170 = vector.broadcast %169 : vector<1x16xf32> to vector<16x16xf32>
      %171 = arith.mulf %166, %170 : vector<16x16xf32>
      %c0_69 = arith.constant 0 : index
      %c0_70 = arith.constant 0 : index
      %172 = vector.load %arg2[%c0_69, %c0_70] : memref<1x16xf32, #tpu.memory_space<vmem>>, vector<1x16xf32>
      %173 = vector.broadcast %172 : vector<1x16xf32> to vector<16x16xf32>
      %174 = arith.mulf %171, %173 : vector<16x16xf32>
      %c0_71 = arith.constant 0 : index
      %c0_72 = arith.constant 0 : index
      %175 = vector.load %arg3[%c0_71, %c0_72] : memref<1x16xf32, #tpu.memory_space<vmem>>, vector<1x16xf32>
      %176 = vector.broadcast %175 : vector<1x16xf32> to vector<16x16xf32>
      %177 = arith.addf %174, %176 : vector<16x16xf32>
      %178 = arith.truncf %177 : vector<16x16xf32> to vector<16x16xbf16>
      %c0_73 = arith.constant 0 : index
      %c0_74 = arith.constant 0 : index
      %179 = vector.load %arg4[%c0_73, %c0_74] : memref<16x32xbf16, #tpu.memory_space<vmem>>, vector<16x32xbf16>
      %cst_75 = arith.constant dense<0.000000e+00> : vector<16x32xf32>
      %180 = tpu.matmul %178, %179, %cst_75 {dimension_numbers = #tpu.dot_dimension_numbers<[1], [0], [0], [1], [0, 0, 1, 1], [], []>} : vector<16x16xbf16>, vector<16x32xbf16>, vector<16x32xf32> -> vector<16x32xf32>
      %c0_76 = arith.constant 0 : index
      %c0_77 = arith.constant 0 : index
      %181 = vector.load %arg5[%c0_76, %c0_77] : memref<1x32xf32, #tpu.memory_space<vmem>>, vector<1x32xf32>
      %182 = vector.broadcast %181 : vector<1x32xf32> to vector<16x32xf32>
      %183 = arith.addf %180, %182 : vector<16x32xf32>
      %cst_78 = arith.constant dense<0.000000e+00> : vector<16xf32>
      %184 = vector.multi_reduction <add>, %183, %cst_78 [1] : vector<16x32xf32> to vector<16xf32>
      %185 = vector.shape_cast %184 : vector<16xf32> to vector<16x1xf32>
      %cst_79 = arith.constant 3.200000e+01 : f32
      %186 = vector.broadcast %cst_79 : f32 to vector<16x1xf32>
      %187 = arith.divf %185, %186 : vector<16x1xf32>
      %188 = vector.broadcast %187 : vector<16x1xf32> to vector<16x32xf32>
      %189 = arith.subf %183, %188 : vector<16x32xf32>
      %190 = arith.mulf %189, %189 : vector<16x32xf32>
      %cst_80 = arith.constant dense<0.000000e+00> : vector<16xf32>
      %191 = vector.multi_reduction <add>, %190, %cst_80 [1] : vector<16x32xf32> to vector<16xf32>
      %192 = vector.shape_cast %191 : vector<16xf32> to vector<16x1xf32>
      %cst_81 = arith.constant 3.200000e+01 : f32
      %193 = vector.broadcast %cst_81 : f32 to vector<16x1xf32>
      %194 = arith.divf %192, %193 : vector<16x1xf32>
      %195 = vector.broadcast %187 : vector<16x1xf32> to vector<16x32xf32>
      %196 = arith.subf %183, %195 : vector<16x32xf32>
      %cst_82 = arith.constant 9.99999974E-6 : f32
      %197 = vector.broadcast %cst_82 : f32 to vector<16x1xf32>
      %198 = arith.addf %194, %197 : vector<16x1xf32>
      %199 = math.rsqrt %198 : vector<16x1xf32>
      %200 = vector.broadcast %199 : vector<16x1xf32> to vector<16x32xf32>
      %201 = arith.mulf %196, %200 : vector<16x32xf32>
      %c0_83 = arith.constant 0 : index
      %c0_84 = arith.constant 0 : index
      %202 = vector.load %arg6[%c0_83, %c0_84] : memref<1x32xf32, #tpu.memory_space<vmem>>, vector<1x32xf32>
      %203 = vector.broadcast %202 : vector<1x32xf32> to vector<16x32xf32>
      %204 = arith.mulf %201, %203 : vector<16x32xf32>
      %c0_85 = arith.constant 0 : index
      %c0_86 = arith.constant 0 : index
      %205 = vector.load %arg7[%c0_85, %c0_86] : memref<1x32xf32, #tpu.memory_space<vmem>>, vector<1x32xf32>
      %206 = vector.broadcast %205 : vector<1x32xf32> to vector<16x32xf32>
      %207 = arith.addf %204, %206 : vector<16x32xf32>
      %208 = vector.shape_cast %207 : vector<16x32xf32> to vector<2x8x32xf32>
      %c0_87 = arith.constant 0 : index
      %c0_88 = arith.constant 0 : index
      %c0_89 = arith.constant 0 : index
      %209 = vector.load %arg20[%c0_87, %c0_88, %c0_89] : memref<2x8x32xf32, #tpu.memory_space<vmem>>, vector<2x8x32xf32>
      tpu.vector_store %arg20[%c0_87, %c0_88, %c0_89], %208 {strides = array<i32>} : memref<2x8x32xf32, #tpu.memory_space<vmem>>, vector<2x8x32xf32>,
    } else {
    }
    %c0 = arith.constant 0 : index
    %c0_1 = arith.constant 0 : index
    %c0_2 = arith.constant 0 : index
    %3 = vector.load %arg20[%c0, %c0_1, %c0_2] : memref<2x8x32xf32, #tpu.memory_space<vmem>>, vector<2x8x32xf32>
    %4 = vector.shape_cast %3 : vector<2x8x32xf32> to vector<16x32xf32>
    %5 = arith.truncf %4 : vector<16x32xf32> to vector<16x32xbf16>
    %c0_3 = arith.constant 0 : index
    %c0_4 = arith.constant 0 : index
    %c0_5 = arith.constant 0 : index
    %6 = vector.load %arg8[%c0_3, %c0_4, %c0_5] : memref<1x32x96xbf16, #tpu.memory_space<vmem>>, vector<1x32x96xbf16>
    %7 = vector.shape_cast %6 : vector<1x32x96xbf16> to vector<32x96xbf16>
    %cst = arith.constant dense<0.000000e+00> : vector<16x96xf32>
    %8 = tpu.matmul %5, %7, %cst {dimension_numbers = #tpu.dot_dimension_numbers<[1], [0], [0], [1], [0, 0, 1, 1], [], []>} : vector<16x32xbf16>, vector<32x96xbf16>, vector<16x96xf32> -> vector<16x96xf32>
    %c0_6 = arith.constant 0 : index
    %c0_7 = arith.constant 0 : index
    %c0_8 = arith.constant 0 : index
    %9 = vector.load %arg9[%c0_6, %c0_7, %c0_8] : memref<1x1x96xf32, #tpu.memory_space<vmem>>, vector<1x1x96xf32>
    %10 = vector.shape_cast %9 : vector<1x1x96xf32> to vector<1x96xf32>
    %11 = vector.broadcast %10 : vector<1x96xf32> to vector<16x96xf32>
    %12 = arith.addf %8, %11 : vector<16x96xf32>
    %13 = vector.extract_strided_slice %12 {offsets = [0, 0], sizes = [16, 32], strides = [1, 1]} : vector<16x96xf32> to vector<16x32xf32>
    %cst_9 = arith.constant 0.353553385 : f32
    %14 = vector.broadcast %cst_9 : f32 to vector<16x32xf32>
    %15 = arith.mulf %13, %14 : vector<16x32xf32>
    %16 = vector.extract_strided_slice %12 {offsets = [0, 32], sizes = [16, 32], strides = [1, 1]} : vector<16x96xf32> to vector<16x32xf32>
    %17 = vector.extract_strided_slice %12 {offsets = [0, 64], sizes = [16, 32], strides = [1, 1]} : vector<16x96xf32> to vector<16x32xf32>
    %18 = vector.extract_strided_slice %15 {offsets = [0, 0], sizes = [16, 8], strides = [1, 1]} : vector<16x32xf32> to vector<16x8xf32>
    %19 = vector.shape_cast %18 : vector<16x8xf32> to vector<2x8x8xf32>
    %20 = vector.extract_strided_slice %15 {offsets = [0, 8], sizes = [16, 8], strides = [1, 1]} : vector<16x32xf32> to vector<16x8xf32>
    %21 = vector.shape_cast %20 : vector<16x8xf32> to vector<2x8x8xf32>
    %22 = vector.extract_strided_slice %15 {offsets = [0, 16], sizes = [16, 8], strides = [1, 1]} : vector<16x32xf32> to vector<16x8xf32>
    %23 = vector.shape_cast %22 : vector<16x8xf32> to vector<2x8x8xf32>
    %24 = vector.extract_strided_slice %15 {offsets = [0, 24], sizes = [16, 8], strides = [1, 1]} : vector<16x32xf32> to vector<16x8xf32>
    %25 = vector.shape_cast %24 : vector<16x8xf32> to vector<2x8x8xf32>
    %26 = tpu.concatenate %19, %21, %23, %25 in 0 : vector<2x8x8xf32>, vector<2x8x8xf32>, vector<2x8x8xf32>, vector<2x8x8xf32> -> vector<8x8x8xf32>
    %27 = arith.truncf %26 : vector<8x8x8xf32> to vector<8x8x8xbf16>
    %28 = vector.extract_strided_slice %16 {offsets = [0, 0], sizes = [16, 8], strides = [1, 1]} : vector<16x32xf32> to vector<16x8xf32>
    %29 = vector.shape_cast %28 : vector<16x8xf32> to vector<2x8x8xf32>
    %30 = vector.extract_strided_slice %16 {offsets = [0, 8], sizes = [16, 8], strides = [1, 1]} : vector<16x32xf32> to vector<16x8xf32>
    %31 = vector.shape_cast %30 : vector<16x8xf32> to vector<2x8x8xf32>
    %32 = vector.extract_strided_slice %16 {offsets = [0, 16], sizes = [16, 8], strides = [1, 1]} : vector<16x32xf32> to vector<16x8xf32>
    %33 = vector.shape_cast %32 : vector<16x8xf32> to vector<2x8x8xf32>
    %34 = vector.extract_strided_slice %16 {offsets = [0, 24], sizes = [16, 8], strides = [1, 1]} : vector<16x32xf32> to vector<16x8xf32>
    %35 = vector.shape_cast %34 : vector<16x8xf32> to vector<2x8x8xf32>
    %36 = tpu.concatenate %29, %31, %33, %35 in 0 : vector<2x8x8xf32>, vector<2x8x8xf32>, vector<2x8x8xf32>, vector<2x8x8xf32> -> vector<8x8x8xf32>
    %37 = arith.truncf %36 : vector<8x8x8xf32> to vector<8x8x8xbf16>
    %38 = vector.extract_strided_slice %17 {offsets = [0, 0], sizes = [16, 8], strides = [1, 1]} : vector<16x32xf32> to vector<16x8xf32>
    %39 = vector.shape_cast %38 : vector<16x8xf32> to vector<2x8x8xf32>
    %40 = vector.extract_strided_slice %17 {offsets = [0, 8], sizes = [16, 8], strides = [1, 1]} : vector<16x32xf32> to vector<16x8xf32>
    %41 = vector.shape_cast %40 : vector<16x8xf32> to vector<2x8x8xf32>
    %42 = vector.extract_strided_slice %17 {offsets = [0, 16], sizes = [16, 8], strides = [1, 1]} : vector<16x32xf32> to vector<16x8xf32>
    %43 = vector.shape_cast %42 : vector<16x8xf32> to vector<2x8x8xf32>
    %44 = vector.extract_strided_slice %17 {offsets = [0, 24], sizes = [16, 8], strides = [1, 1]} : vector<16x32xf32> to vector<16x8xf32>
    %45 = vector.shape_cast %44 : vector<16x8xf32> to vector<2x8x8xf32>
    %46 = tpu.concatenate %39, %41, %43, %45 in 0 : vector<2x8x8xf32>, vector<2x8x8xf32>, vector<2x8x8xf32>, vector<2x8x8xf32> -> vector<8x8x8xf32>
    %47 = arith.truncf %46 : vector<8x8x8xf32> to vector<8x8x8xbf16>
    %cst_10 = arith.constant dense<0.000000e+00> : vector<8x8x8xf32>
    %48 = tpu.matmul %27, %37, %cst_10 {dimension_numbers = #tpu.dot_dimension_numbers<[2], [2], [1], [1], [0, 0, 0, 1, 1, 1], [0], [0]>} : vector<8x8x8xbf16>, vector<8x8x8xbf16>, vector<8x8x8xf32> -> vector<8x8x8xf32>
    %cst_11 = arith.constant dense<0xFF800000> : vector<8x8xf32>
    %49 = vector.multi_reduction <maximumf>, %48, %cst_11 [2] : vector<8x8x8xf32> to vector<8x8xf32>
    %50 = vector.shape_cast %49 : vector<8x8xf32> to vector<8x8x1xf32>
    %51 = vector.broadcast %50 : vector<8x8x1xf32> to vector<8x8x8xf32>
    %52 = arith.subf %48, %51 : vector<8x8x8xf32>
    %53 = math.exp %52 : vector<8x8x8xf32>
    %cst_12 = arith.constant dense<0.000000e+00> : vector<8x8xf32>
    %54 = vector.multi_reduction <add>, %53, %cst_12 [2] : vector<8x8x8xf32> to vector<8x8xf32>
    %55 = vector.shape_cast %54 : vector<8x8xf32> to vector<8x8x1xf32>
    %56 = tpu.reciprocal %55 {approx = true} : vector<8x8x1xf32> -> vector<8x8x1xf32>
    %57 = vector.broadcast %56 : vector<8x8x1xf32> to vector<8x8x8xf32>
    %58 = arith.mulf %53, %57 : vector<8x8x8xf32>
    %59 = arith.truncf %58 : vector<8x8x8xf32> to vector<8x8x8xbf16>
    %cst_13 = arith.constant dense<0.000000e+00> : vector<8x8x8xf32>
    %60 = tpu.matmul %59, %47, %cst_13 {dimension_numbers = #tpu.dot_dimension_numbers<[2], [1], [1], [2], [0, 0, 0, 1, 1, 2], [0], [0]>} : vector<8x8x8xbf16>, vector<8x8x8xbf16>, vector<8x8x8xf32> -> vector<8x8x8xf32>
    %61 = vector.extract_strided_slice %60 {offsets = [0, 0, 0], sizes = [2, 8, 8], strides = [1, 1, 1]} : vector<8x8x8xf32> to vector<2x8x8xf32>
    %62 = vector.shape_cast %61 : vector<2x8x8xf32> to vector<16x8xf32>
    %63 = vector.extract_strided_slice %60 {offsets = [2, 0, 0], sizes = [2, 8, 8], strides = [1, 1, 1]} : vector<8x8x8xf32> to vector<2x8x8xf32>
    %64 = vector.shape_cast %63 : vector<2x8x8xf32> to vector<16x8xf32>
    %65 = vector.extract_strided_slice %60 {offsets = [4, 0, 0], sizes = [2, 8, 8], strides = [1, 1, 1]} : vector<8x8x8xf32> to vector<2x8x8xf32>
    %66 = vector.shape_cast %65 : vector<2x8x8xf32> to vector<16x8xf32>
    %67 = vector.extract_strided_slice %60 {offsets = [6, 0, 0], sizes = [2, 8, 8], strides = [1, 1, 1]} : vector<8x8x8xf32> to vector<2x8x8xf32>
    %68 = vector.shape_cast %67 : vector<2x8x8xf32> to vector<16x8xf32>
    %69 = tpu.concatenate %62, %64, %66, %68 in 1 : vector<16x8xf32>, vector<16x8xf32>, vector<16x8xf32>, vector<16x8xf32> -> vector<16x32xf32>
    %70 = arith.truncf %69 : vector<16x32xf32> to vector<16x32xbf16>
    %c0_14 = arith.constant 0 : index
    %c0_15 = arith.constant 0 : index
    %c0_16 = arith.constant 0 : index
    %71 = vector.load %arg10[%c0_14, %c0_15, %c0_16] : memref<1x32x32xbf16, #tpu.memory_space<vmem>>, vector<1x32x32xbf16>
    %72 = vector.shape_cast %71 : vector<1x32x32xbf16> to vector<32x32xbf16>
    %cst_17 = arith.constant dense<0.000000e+00> : vector<16x32xf32>
    %73 = tpu.matmul %70, %72, %cst_17 {dimension_numbers = #tpu.dot_dimension_numbers<[1], [0], [0], [1], [0, 0, 1, 1], [], []>} : vector<16x32xbf16>, vector<32x32xbf16>, vector<16x32xf32> -> vector<16x32xf32>
    %c0_18 = arith.constant 0 : index
    %c0_19 = arith.constant 0 : index
    %c0_20 = arith.constant 0 : index
    %74 = vector.load %arg11[%c0_18, %c0_19, %c0_20] : memref<1x1x32xf32, #tpu.memory_space<vmem>>, vector<1x1x32xf32>
    %75 = vector.shape_cast %74 : vector<1x1x32xf32> to vector<1x32xf32>
    %76 = vector.broadcast %75 : vector<1x32xf32> to vector<16x32xf32>
    %77 = arith.addf %73, %76 : vector<16x32xf32>
    %78 = arith.addf %4, %77 : vector<16x32xf32>
    %cst_21 = arith.constant dense<0.000000e+00> : vector<16xf32>
    %79 = vector.multi_reduction <add>, %78, %cst_21 [1] : vector<16x32xf32> to vector<16xf32>
    %80 = vector.shape_cast %79 : vector<16xf32> to vector<16x1xf32>
    %cst_22 = arith.constant 3.200000e+01 : f32
    %81 = vector.broadcast %cst_22 : f32 to vector<16x1xf32>
    %82 = arith.divf %80, %81 : vector<16x1xf32>
    %83 = vector.broadcast %82 : vector<16x1xf32> to vector<16x32xf32>
    %84 = arith.subf %78, %83 : vector<16x32xf32>
    %85 = arith.mulf %84, %84 : vector<16x32xf32>
    %cst_23 = arith.constant dense<0.000000e+00> : vector<16xf32>
    %86 = vector.multi_reduction <add>, %85, %cst_23 [1] : vector<16x32xf32> to vector<16xf32>
    %87 = vector.shape_cast %86 : vector<16xf32> to vector<16x1xf32>
    %cst_24 = arith.constant 3.200000e+01 : f32
    %88 = vector.broadcast %cst_24 : f32 to vector<16x1xf32>
    %89 = arith.divf %87, %88 : vector<16x1xf32>
    %90 = vector.broadcast %82 : vector<16x1xf32> to vector<16x32xf32>
    %91 = arith.subf %78, %90 : vector<16x32xf32>
    %cst_25 = arith.constant 9.99999974E-6 : f32
    %92 = vector.broadcast %cst_25 : f32 to vector<16x1xf32>
    %93 = arith.addf %89, %92 : vector<16x1xf32>
    %94 = math.rsqrt %93 : vector<16x1xf32>
    %95 = vector.broadcast %94 : vector<16x1xf32> to vector<16x32xf32>
    %96 = arith.mulf %91, %95 : vector<16x32xf32>
    %c0_26 = arith.constant 0 : index
    %c0_27 = arith.constant 0 : index
    %c0_28 = arith.constant 0 : index
    %97 = vector.load %arg12[%c0_26, %c0_27, %c0_28] : memref<1x1x32xf32, #tpu.memory_space<vmem>>, vector<1x1x32xf32>
    %98 = vector.shape_cast %97 : vector<1x1x32xf32> to vector<1x32xf32>
    %99 = vector.broadcast %98 : vector<1x32xf32> to vector<16x32xf32>
    %100 = arith.mulf %96, %99 : vector<16x32xf32>
    %c0_29 = arith.constant 0 : index
    %c0_30 = arith.constant 0 : index
    %c0_31 = arith.constant 0 : index
    %101 = vector.load %arg13[%c0_29, %c0_30, %c0_31] : memref<1x1x32xf32, #tpu.memory_space<vmem>>, vector<1x1x32xf32>
    %102 = vector.shape_cast %101 : vector<1x1x32xf32> to vector<1x32xf32>
    %103 = vector.broadcast %102 : vector<1x32xf32> to vector<16x32xf32>
    %104 = arith.addf %100, %103 : vector<16x32xf32>
    %105 = arith.truncf %104 : vector<16x32xf32> to vector<16x32xbf16>
    %c0_32 = arith.constant 0 : index
    %c0_33 = arith.constant 0 : index
    %c0_34 = arith.constant 0 : index
    %106 = vector.load %arg14[%c0_32, %c0_33, %c0_34] : memref<1x32x64xbf16, #tpu.memory_space<vmem>>, vector<1x32x64xbf16>
    %107 = vector.shape_cast %106 : vector<1x32x64xbf16> to vector<32x64xbf16>
    %cst_35 = arith.constant dense<0.000000e+00> : vector<16x64xf32>
    %108 = tpu.matmul %105, %107, %cst_35 {dimension_numbers = #tpu.dot_dimension_numbers<[1], [0], [0], [1], [0, 0, 1, 1], [], []>} : vector<16x32xbf16>, vector<32x64xbf16>, vector<16x64xf32> -> vector<16x64xf32>
    %c0_36 = arith.constant 0 : index
    %c0_37 = arith.constant 0 : index
    %c0_38 = arith.constant 0 : index
    %109 = vector.load %arg15[%c0_36, %c0_37, %c0_38] : memref<1x1x64xf32, #tpu.memory_space<vmem>>, vector<1x1x64xf32>
    %110 = vector.shape_cast %109 : vector<1x1x64xf32> to vector<1x64xf32>
    %111 = vector.broadcast %110 : vector<1x64xf32> to vector<16x64xf32>
    %112 = arith.addf %108, %111 : vector<16x64xf32>
    %cst_39 = arith.constant 0.000000e+00 : f32
    %113 = vector.broadcast %cst_39 : f32 to vector<16x64xf32>
    %114 = arith.maximumf %112, %113 : vector<16x64xf32>
    %115 = arith.truncf %114 : vector<16x64xf32> to vector<16x64xbf16>
    %c0_40 = arith.constant 0 : index
    %c0_41 = arith.constant 0 : index
    %c0_42 = arith.constant 0 : index
    %116 = vector.load %arg16[%c0_40, %c0_41, %c0_42] : memref<1x64x32xbf16, #tpu.memory_space<vmem>>, vector<1x64x32xbf16>
    %117 = vector.shape_cast %116 : vector<1x64x32xbf16> to vector<64x32xbf16>
    %cst_43 = arith.constant dense<0.000000e+00> : vector<16x32xf32>
    %118 = tpu.matmul %115, %117, %cst_43 {dimension_numbers = #tpu.dot_dimension_numbers<[1], [0], [0], [1], [0, 0, 1, 1], [], []>} : vector<16x64xbf16>, vector<64x32xbf16>, vector<16x32xf32> -> vector<16x32xf32>
    %c0_44 = arith.constant 0 : index
    %c0_45 = arith.constant 0 : index
    %c0_46 = arith.constant 0 : index
    %119 = vector.load %arg17[%c0_44, %c0_45, %c0_46] : memref<1x1x32xf32, #tpu.memory_space<vmem>>, vector<1x1x32xf32>
    %120 = vector.shape_cast %119 : vector<1x1x32xf32> to vector<1x32xf32>
    %121 = vector.broadcast %120 : vector<1x32xf32> to vector<16x32xf32>
    %122 = arith.addf %118, %121 : vector<16x32xf32>
    %123 = arith.addf %104, %122 : vector<16x32xf32>
    %cst_47 = arith.constant dense<0.000000e+00> : vector<16xf32>
    %124 = vector.multi_reduction <add>, %123, %cst_47 [1] : vector<16x32xf32> to vector<16xf32>
    %125 = vector.shape_cast %124 : vector<16xf32> to vector<16x1xf32>
    %cst_48 = arith.constant 3.200000e+01 : f32
    %126 = vector.broadcast %cst_48 : f32 to vector<16x1xf32>
    %127 = arith.divf %125, %126 : vector<16x1xf32>
    %128 = vector.broadcast %127 : vector<16x1xf32> to vector<16x32xf32>
    %129 = arith.subf %123, %128 : vector<16x32xf32>
    %130 = arith.mulf %129, %129 : vector<16x32xf32>
    %cst_49 = arith.constant dense<0.000000e+00> : vector<16xf32>
    %131 = vector.multi_reduction <add>, %130, %cst_49 [1] : vector<16x32xf32> to vector<16xf32>
    %132 = vector.shape_cast %131 : vector<16xf32> to vector<16x1xf32>
    %cst_50 = arith.constant 3.200000e+01 : f32
    %133 = vector.broadcast %cst_50 : f32 to vector<16x1xf32>
    %134 = arith.divf %132, %133 : vector<16x1xf32>
    %135 = vector.broadcast %127 : vector<16x1xf32> to vector<16x32xf32>
    %136 = arith.subf %123, %135 : vector<16x32xf32>
    %cst_51 = arith.constant 9.99999974E-6 : f32
    %137 = vector.broadcast %cst_51 : f32 to vector<16x1xf32>
    %138 = arith.addf %134, %137 : vector<16x1xf32>
    %139 = math.rsqrt %138 : vector<16x1xf32>
    %140 = vector.broadcast %139 : vector<16x1xf32> to vector<16x32xf32>
    %141 = arith.mulf %136, %140 : vector<16x32xf32>
    %c0_52 = arith.constant 0 : index
    %c0_53 = arith.constant 0 : index
    %c0_54 = arith.constant 0 : index
    %142 = vector.load %arg18[%c0_52, %c0_53, %c0_54] : memref<1x1x32xf32, #tpu.memory_space<vmem>>, vector<1x1x32xf32>
    %143 = vector.shape_cast %142 : vector<1x1x32xf32> to vector<1x32xf32>
    %144 = vector.broadcast %143 : vector<1x32xf32> to vector<16x32xf32>
    %145 = arith.mulf %141, %144 : vector<16x32xf32>
    %c0_55 = arith.constant 0 : index
    %c0_56 = arith.constant 0 : index
    %c0_57 = arith.constant 0 : index
    %146 = vector.load %arg19[%c0_55, %c0_56, %c0_57] : memref<1x1x32xf32, #tpu.memory_space<vmem>>, vector<1x1x32xf32>
    %147 = vector.shape_cast %146 : vector<1x1x32xf32> to vector<1x32xf32>
    %148 = vector.broadcast %147 : vector<1x32xf32> to vector<16x32xf32>
    %149 = arith.addf %145, %148 : vector<16x32xf32>
    %150 = vector.shape_cast %149 : vector<16x32xf32> to vector<2x8x32xf32>
    %c0_58 = arith.constant 0 : index
    %c0_59 = arith.constant 0 : index
    %c0_60 = arith.constant 0 : index
    %151 = vector.load %arg20[%c0_58, %c0_59, %c0_60] : memref<2x8x32xf32, #tpu.memory_space<vmem>>, vector<2x8x32xf32>
    tpu.vector_store %arg20[%c0_58, %c0_59, %c0_60], %150 {strides = array<i32>} : memref<2x8x32xf32, #tpu.memory_space<vmem>>, vector<2x8x32xf32>,
    return
  }
  func.func @transform_0(%arg0: i32) -> (i32, i32, i32) {
    %c0_i32 = arith.constant 0 : i32
    %c0_i32_0 = arith.constant 0 : i32
    %c0_i32_1 = arith.constant 0 : i32
    %c0_i32_2 = arith.constant 0 : i32
    return %c0_i32, %c0_i32_0, %c0_i32_1 : i32, i32, i32
  }
  func.func @transform_1(%arg0: i32) -> (i32, i32) {
    %c0_i32 = arith.constant 0 : i32
    %c0_i32_0 = arith.constant 0 : i32
    %c0_i32_1 = arith.constant 0 : i32
    return %c0_i32, %c0_i32_0 : i32, i32
  }
  func.func @transform_2(%arg0: i32) -> (i32, i32) {
    %c0_i32 = arith.constant 0 : i32
    %c0_i32_0 = arith.constant 0 : i32
    %c0_i32_1 = arith.constant 0 : i32
    return %c0_i32, %c0_i32_0 : i32, i32
  }
  func.func @transform_3(%arg0: i32) -> (i32, i32) {
    %c0_i32 = arith.constant 0 : i32
    %c0_i32_0 = arith.constant 0 : i32
    %c0_i32_1 = arith.constant 0 : i32
    return %c0_i32, %c0_i32_0 : i32, i32
  }
  func.func @transform_4(%arg0: i32) -> (i32, i32) {
    %c0_i32 = arith.constant 0 : i32
    %c0_i32_0 = arith.constant 0 : i32
    %c0_i32_1 = arith.constant 0 : i32
    return %c0_i32, %c0_i32_0 : i32, i32
  }
  func.func @transform_5(%arg0: i32) -> (i32, i32) {
    %c0_i32 = arith.constant 0 : i32
    %c0_i32_0 = arith.constant 0 : i32
    %c0_i32_1 = arith.constant 0 : i32
    return %c0_i32, %c0_i32_0 : i32, i32
  }
  func.func @transform_6(%arg0: i32) -> (i32, i32) {
    %c0_i32 = arith.constant 0 : i32
    %c0_i32_0 = arith.constant 0 : i32
    %c0_i32_1 = arith.constant 0 : i32
    return %c0_i32, %c0_i32_0 : i32, i32
  }
  func.func @transform_7(%arg0: i32) -> (i32, i32, i32) {
    %c0_i32 = arith.constant 0 : i32
    %c0_i32_0 = arith.constant 0 : i32
    %c0_i32_1 = arith.constant 0 : i32
    return %arg0, %c0_i32, %c0_i32_0 : i32, i32, i32
  }
  func.func @transform_8(%arg0: i32) -> (i32, i32, i32) {
    %c0_i32 = arith.constant 0 : i32
    %c0_i32_0 = arith.constant 0 : i32
    %c0_i32_1 = arith.constant 0 : i32
    return %arg0, %c0_i32, %c0_i32_0 : i32, i32, i32
  }
  func.func @transform_9(%arg0: i32) -> (i32, i32, i32) {
    %c0_i32 = arith.constant 0 : i32
    %c0_i32_0 = arith.constant 0 : i32
    %c0_i32_1 = arith.constant 0 : i32
    return %arg0, %c0_i32, %c0_i32_0 : i32, i32, i32
  }
  func.func @transform_10(%arg0: i32) -> (i32, i32, i32) {
    %c0_i32 = arith.constant 0 : i32
    %c0_i32_0 = arith.constant 0 : i32
    %c0_i32_1 = arith.constant 0 : i32
    return %arg0, %c0_i32, %c0_i32_0 : i32, i32, i32
  }
  func.func @transform_11(%arg0: i32) -> (i32, i32, i32) {
    %c0_i32 = arith.constant 0 : i32
    %c0_i32_0 = arith.constant 0 : i32
    %c0_i32_1 = arith.constant 0 : i32
    return %arg0, %c0_i32, %c0_i32_0 : i32, i32, i32
  }
  func.func @transform_12(%arg0: i32) -> (i32, i32, i32) {
    %c0_i32 = arith.constant 0 : i32
    %c0_i32_0 = arith.constant 0 : i32
    %c0_i32_1 = arith.constant 0 : i32
    return %arg0, %c0_i32, %c0_i32_0 : i32, i32, i32
  }
  func.func @transform_13(%arg0: i32) -> (i32, i32, i32) {
    %c0_i32 = arith.constant 0 : i32
    %c0_i32_0 = arith.constant 0 : i32
    %c0_i32_1 = arith.constant 0 : i32
    return %arg0, %c0_i32, %c0_i32_0 : i32, i32, i32
  }
  func.func @transform_14(%arg0: i32) -> (i32, i32, i32) {
    %c0_i32 = arith.constant 0 : i32
    %c0_i32_0 = arith.constant 0 : i32
    %c0_i32_1 = arith.constant 0 : i32
    return %arg0, %c0_i32, %c0_i32_0 : i32, i32, i32
  }
  func.func @transform_15(%arg0: i32) -> (i32, i32, i32) {
    %c0_i32 = arith.constant 0 : i32
    %c0_i32_0 = arith.constant 0 : i32
    %c0_i32_1 = arith.constant 0 : i32
    return %arg0, %c0_i32, %c0_i32_0 : i32, i32, i32
  }
  func.func @transform_16(%arg0: i32) -> (i32, i32, i32) {
    %c0_i32 = arith.constant 0 : i32
    %c0_i32_0 = arith.constant 0 : i32
    %c0_i32_1 = arith.constant 0 : i32
    return %arg0, %c0_i32, %c0_i32_0 : i32, i32, i32
  }
  func.func @transform_17(%arg0: i32) -> (i32, i32, i32) {
    %c0_i32 = arith.constant 0 : i32
    %c0_i32_0 = arith.constant 0 : i32
    %c0_i32_1 = arith.constant 0 : i32
    return %arg0, %c0_i32, %c0_i32_0 : i32, i32, i32
  }
  func.func @transform_18(%arg0: i32) -> (i32, i32, i32) {
    %c0_i32 = arith.constant 0 : i32
    %c0_i32_0 = arith.constant 0 : i32
    %c0_i32_1 = arith.constant 0 : i32
    return %arg0, %c0_i32, %c0_i32_0 : i32, i32, i32
  }
  func.func @transform_19(%arg0: i32) -> (i32, i32, i32) {
    %c0_i32 = arith.constant 0 : i32
    %c0_i32_0 = arith.constant 0 : i32
    %c0_i32_1 = arith.constant 0 : i32
    %c0_i32_2 = arith.constant 0 : i32
    return %c0_i32, %c0_i32_0, %c0_i32_1 : i32, i32, i32
  }
}

</mosaic_0001>

<llo_original>
// kernel: tpu_custom_call.1
$region0: #{tpu_custom_call.1}
  #allocation0 [shape = 'u32[]', space=smem, size = 0x4, offset = 0x4, fixed_abs, tag = 'smem constant byte address 0x4 - core index']
  #allocation1 [shape = 'u32[144,128]{1,0:T(1,128)}', space=vmem, size = 0x12000, scoped, tag = 'internal scratch']
  %s0 = inlined_call_operand.hbm [shape: f32[2,8,16], index: 0, kind: input, shape index: {}]
  %s1 = inlined_call_operand.hbm [shape: f32[1,16], index: 1, kind: input, shape index: {}]
  %s2 = inlined_call_operand.hbm [shape: f32[1,16], index: 2, kind: input, shape index: {}]
  %s3 = inlined_call_operand.vmem [shape: bf16[16,32], index: 3, kind: input, shape index: {}]
  %s4 = inlined_call_operand.hbm [shape: f32[1,32], index: 4, kind: input, shape index: {}]
  %s5 = inlined_call_operand.hbm [shape: f32[1,32], index: 5, kind: input, shape index: {}]
  %s6 = inlined_call_operand.hbm [shape: f32[1,32], index: 6, kind: input, shape index: {}]
  %s7 = inlined_call_operand.vmem [shape: bf16[2,32,96], index: 7, kind: input, shape index: {}]
  %s8 = inlined_call_operand.vmem [shape: f32[2,1,96], index: 8, kind: input, shape index: {}]
  %s9 = inlined_call_operand.vmem [shape: bf16[2,32,32], index: 9, kind: input, shape index: {}]
  %s10 = inlined_call_operand.vmem [shape: f32[2,1,32], index: 10, kind: input, shape index: {}]
  %s11 = inlined_call_operand.vmem [shape: f32[2,1,32], index: 11, kind: input, shape index: {}]
  %s12 = inlined_call_operand.vmem [shape: f32[2,1,32], index: 12, kind: input, shape index: {}]
  %s13 = inlined_call_operand.vmem [shape: bf16[2,32,64], index: 13, kind: input, shape index: {}]
  %s14 = inlined_call_operand.vmem [shape: f32[2,1,64], index: 14, kind: input, shape index: {}]
  %s15 = inlined_call_operand.vmem [shape: bf16[2,64,32], index: 15, kind: input, shape index: {}]
  %s16 = inlined_call_operand.vmem [shape: f32[2,1,32], index: 16, kind: input, shape index: {}]
  %s17 = inlined_call_operand.vmem [shape: f32[2,1,32], index: 17, kind: input, shape index: {}]
  %s18 = inlined_call_operand.vmem [shape: f32[2,1,32], index: 18, kind: input, shape index: {}]
  %s19 = inlined_call_operand.hbm [shape: f32[2,8,32], index: 19, kind: output, shape index: {}]
  %s20 = sld [smem:[#allocation0]]
  $region137: #{tpu_custom_call.1} parent=0
    _
  %s22 = ssub.s32 1, %s20
  %s23 = scalar_select 0, %s22, %s20
  $region1: #{tpu_custom_call.1} parent=0
    #allocation2 [shape = 'u8[8192]{0}', space=vmem, size = 0x2000, scoped, tag = 'input window, operand 0, single buffered']
    #allocation3 [shape = 's32[2]{0}', space=sflag, size = 0x8, scoped, tag = 'scoped memory for tpu_custom_call.1']
    #allocation4 [shape = 's32[2]{0}', space=sflag, size = 0x8, scoped, tag = 'scoped memory for tpu_custom_call.1']
    #allocation5 [shape = 'u8[512]{0}', space=vmem, size = 0x400, scoped, tag = 'input window, operand 1, single buffered']
    #allocation6 [shape = 's32[1]{0}', space=sflag, size = 0x4, scoped, tag = 'scoped memory for tpu_custom_call.1']
    #allocation7 [shape = 'u8[512]{0}', space=vmem, size = 0x400, scoped, tag = 'input window, operand 2, single buffered']
    #allocation8 [shape = 'u8[512]{0}', space=vmem, size = 0x400, scoped, tag = 'input window, operand 4, single buffered']
    #allocation9 [shape = 's32[1]{0}', space=sflag, size = 0x4, scoped, tag = 'scoped memory for tpu_custom_call.1']
    #allocation10 [shape = 'u8[512]{0}', space=vmem, size = 0x400, scoped, tag = 'input window, operand 5, single buffered']
    #allocation11 [shape = 'u8[512]{0}', space=vmem, size = 0x400, scoped, tag = 'input window, operand 6, single buffered']
    #allocation12 [shape = 's32[1]{0}', space=sflag, size = 0x4, scoped, tag = 'scoped memory for tpu_custom_call.1']
    #allocation13 [shape = 'u8[8192]{0}', space=vmem, size = 0x2000, scoped, tag = 'output window, operand 0, single buffered']
    %24 = vsyncpa [#allocation3], 0
    %25 = vsyncpa [#allocation6], 0
    %26 = vsyncpa [#allocation9], 0
    %27 = vsyncpa [#allocation12], 0
    %28 = vsyncpa [#allocation4], 0
    loop: start=0, step=1, limit=4
    $region2: #{tpu_custom_call.1} parent=1 // loop_pre_header
      _
    $region3: #{tpu_custom_call.1} parent=1 // loop_header
      %s30 = sphi 0, %s34
      %p31 = scmp.ge.s32.totalorder %s30, 4
      %s38 = sphi 0, %s38
      %s40 = sphi 0, %s38
      %s41 = sphi 0, %s40
      %s55 = sphi 0, %s41
      %s59 = sphi 0, %s59
      %s61 = sphi 0, %s59
      %s62 = sphi 0, %s61
      %s76 = sphi 0, %s62
      %s80 = sphi 0, %s80
      %s82 = sphi 0, %s80
      %s83 = sphi 0, %s82
      %s97 = sphi 0, %s83
      %s101 = sphi 0, %s101
      %s103 = sphi 0, %s101
      %s104 = sphi 0, %s103
      %s118 = sphi 0, %s104
      %s122 = sphi 0, %s122
      %s124 = sphi 0, %s122
      %s125 = sphi 0, %s124
      %s139 = sphi 0, %s125
      %s143 = sphi 0, %s143
      %s145 = sphi 0, %s143
      %s146 = sphi 0, %s145
      %s160 = sphi 0, %s146
      %s164 = sphi 0, %s164
      %s166 = sphi 0, %s164
      %s167 = sphi 0, %s166
      %s181 = sphi 0, %s167
      %s187 = sphi 0, %s189
      %s190 = sphi 0, %s187
      %s191 = sphi 0, %s190
      %s207 = sphi 0, %s191
      %s213 = sphi 0, %s215
      %s216 = sphi 0, %s213
      %s217 = sphi 0, %s216
      %s233 = sphi 0, %s217
      %s239 = sphi 0, %s241
      %s242 = sphi 0, %s239
      %s243 = sphi 0, %s242
      %s259 = sphi 0, %s243
      %s265 = sphi 0, %s267
      %s268 = sphi 0, %s265
      %s269 = sphi 0, %s268
      %s285 = sphi 0, %s269
      %s291 = sphi 0, %s293
      %s294 = sphi 0, %s291
      %s295 = sphi 0, %s294
      %s311 = sphi 0, %s295
      %s317 = sphi 0, %s319
      %s320 = sphi 0, %s317
      %s321 = sphi 0, %s320
      %s337 = sphi 0, %s321
      %s343 = sphi 0, %s345
      %s346 = sphi 0, %s343
      %s347 = sphi 0, %s346
      %s363 = sphi 0, %s347
      %s369 = sphi 0, %s371
      %s372 = sphi 0, %s369
      %s373 = sphi 0, %s372
      %s389 = sphi 0, %s373
      %s395 = sphi 0, %s397
      %s398 = sphi 0, %s395
      %s399 = sphi 0, %s398
      %s415 = sphi 0, %s399
      %s421 = sphi 0, %s423
      %s424 = sphi 0, %s421
      %s425 = sphi 0, %s424
      %s441 = sphi 0, %s425
      %s447 = sphi 0, %s449
      %s450 = sphi 0, %s447
      %s451 = sphi 0, %s450
      %s467 = sphi 0, %s451
      %s473 = sphi 0, %s475
      %s476 = sphi 0, %s473
      %s477 = sphi 0, %s476
      %s493 = sphi 0, %s477
      %s497 = sphi 0, %s497
      %s499 = sphi 0, %s497
      %s500 = sphi 0, %s499
      %s514 = sphi 0, %s500
    $region4: #{tpu_custom_call.1} parent=1 // loop_header_branch
      %33 = sbr.rel (%p31) target = $region8
    $region5: #{tpu_custom_call.1} parent=1 // loop_body
      %s35 = ssub.s32 %s30, 1
      %s36 = ssub.s32 %s30, 2
      %s37 = sadd.s32 %s30, 1
      %s39 = sadd.s32 %s38, 1
      %p42 = scmp.eq.s32.totalorder %s30, 1
      %p43 = scmp.ne.s32.totalorder %s38, %s40
      %p44 = scmp.eq.s32.totalorder %s30, 0
      %p45 = por %p43, %p44
      %p46 = scmp.ne.s32.totalorder %s38, %s40
      %p47 = scmp.eq.s32.totalorder %s35, 1
      %p48 = por %p46, %p47
      %p49 = scmp.ne.s32.totalorder %s40, %s41
      %p50 = scmp.eq.s32.totalorder %s35, 0
      %p51 = por %p49, %p50
      %p52 = scmp.ne.s32.totalorder %s40, %s41
      %p53 = scmp.eq.s32.totalorder %s36, 1
      %p54 = por %p52, %p53
      %p56 = scmp.ne.s32.totalorder %s41, %s55
      %p57 = scmp.eq.s32.totalorder %s36, 0
      %p58 = por %p56, %p57
      %s60 = sadd.s32 %s59, 1
      %p63 = scmp.eq.s32.totalorder %s30, 1
      %p64 = scmp.ne.s32.totalorder %s59, %s61
      %p65 = scmp.eq.s32.totalorder %s30, 0
      %p66 = por %p64, %p65
      %p67 = scmp.ne.s32.totalorder %s59, %s61
      %p68 = scmp.eq.s32.totalorder %s35, 1
      %p69 = por %p67, %p68
      %p70 = scmp.ne.s32.totalorder %s61, %s62
      %p71 = scmp.eq.s32.totalorder %s35, 0
      %p72 = por %p70, %p71
      %p73 = scmp.ne.s32.totalorder %s61, %s62
      %p74 = scmp.eq.s32.totalorder %s36, 1
      %p75 = por %p73, %p74
      %p77 = scmp.ne.s32.totalorder %s62, %s76
      %p78 = scmp.eq.s32.totalorder %s36, 0
      %p79 = por %p77, %p78
      %s81 = sadd.s32 %s80, 1
      %p84 = scmp.eq.s32.totalorder %s30, 1
      %p85 = scmp.ne.s32.totalorder %s80, %s82
      %p86 = scmp.eq.s32.totalorder %s30, 0
      %p87 = por %p85, %p86
      %p88 = scmp.ne.s32.totalorder %s80, %s82
      %p89 = scmp.eq.s32.totalorder %s35, 1
      %p90 = por %p88, %p89
      %p91 = scmp.ne.s32.totalorder %s82, %s83
      %p92 = scmp.eq.s32.totalorder %s35, 0
      %p93 = por %p91, %p92
      %p94 = scmp.ne.s32.totalorder %s82, %s83
      %p95 = scmp.eq.s32.totalorder %s36, 1
      %p96 = por %p94, %p95
      %p98 = scmp.ne.s32.totalorder %s83, %s97
      %p99 = scmp.eq.s32.totalorder %s36, 0
      %p100 = por %p98, %p99
      %s102 = sadd.s32 %s101, 1
      %p105 = scmp.eq.s32.totalorder %s30, 1
      %p106 = scmp.ne.s32.totalorder %s101, %s103
      %p107 = scmp.eq.s32.totalorder %s30, 0
      %p108 = por %p106, %p107
      %p109 = scmp.ne.s32.totalorder %s101, %s103
      %p110 = scmp.eq.s32.totalorder %s35, 1
      %p111 = por %p109, %p110
      %p112 = scmp.ne.s32.totalorder %s103, %s104
      %p113 = scmp.eq.s32.totalorder %s35, 0
      %p114 = por %p112, %p113
      %p115 = scmp.ne.s32.totalorder %s103, %s104
      %p116 = scmp.eq.s32.totalorder %s36, 1
      %p117 = por %p115, %p116
      %p119 = scmp.ne.s32.totalorder %s104, %s118
      %p120 = scmp.eq.s32.totalorder %s36, 0
      %p121 = por %p119, %p120
      %s123 = sadd.s32 %s122, 1
      %p126 = scmp.eq.s32.totalorder %s30, 1
      %p127 = scmp.ne.s32.totalorder %s122, %s124
      %p128 = scmp.eq.s32.totalorder %s30, 0
      %p129 = por %p127, %p128
      %p130 = scmp.ne.s32.totalorder %s122, %s124
      %p131 = scmp.eq.s32.totalorder %s35, 1
      %p132 = por %p130, %p131
      %p133 = scmp.ne.s32.totalorder %s124, %s125
      %p134 = scmp.eq.s32.totalorder %s35, 0
      %p135 = por %p133, %p134
      %p136 = scmp.ne.s32.totalorder %s124, %s125
      %p137 = scmp.eq.s32.totalorder %s36, 1
      %p138 = por %p136, %p137
      %p140 = scmp.ne.s32.totalorder %s125, %s139
      %p141 = scmp.eq.s32.totalorder %s36, 0
      %p142 = por %p140, %p141
      %s144 = sadd.s32 %s143, 1
      %p147 = scmp.eq.s32.totalorder %s30, 1
      %p148 = scmp.ne.s32.totalorder %s143, %s145
      %p149 = scmp.eq.s32.totalorder %s30, 0
      %p150 = por %p148, %p149
      %p151 = scmp.ne.s32.totalorder %s143, %s145
      %p152 = scmp.eq.s32.totalorder %s35, 1
      %p153 = por %p151, %p152
      %p154 = scmp.ne.s32.totalorder %s145, %s146
      %p155 = scmp.eq.s32.totalorder %s35, 0
      %p156 = por %p154, %p155
      %p157 = scmp.ne.s32.totalorder %s145, %s146
      %p158 = scmp.eq.s32.totalorder %s36, 1
      %p159 = por %p157, %p158
      %p161 = scmp.ne.s32.totalorder %s146, %s160
      %p162 = scmp.eq.s32.totalorder %s36, 0
      %p163 = por %p161, %p162
      %s165 = sadd.s32 %s164, 1
      %p168 = scmp.eq.s32.totalorder %s30, 1
      %p169 = scmp.ne.s32.totalorder %s164, %s166
      %p170 = scmp.eq.s32.totalorder %s30, 0
      %p171 = por %p169, %p170
      %p172 = scmp.ne.s32.totalorder %s164, %s166
      %p173 = scmp.eq.s32.totalorder %s35, 1
      %p174 = por %p172, %p173
      %p175 = scmp.ne.s32.totalorder %s166, %s167
      %p176 = scmp.eq.s32.totalorder %s35, 0
      %p177 = por %p175, %p176
      %p178 = scmp.ne.s32.totalorder %s166, %s167
      %p179 = scmp.eq.s32.totalorder %s36, 1
      %p180 = por %p178, %p179
      %p182 = scmp.ne.s32.totalorder %s167, %s181
      %p183 = scmp.eq.s32.totalorder %s36, 0
      %p184 = por %p182, %p183
      %s185 = ssub.s32 %s30, %s37
      %p186 = scmp.eq.s32.totalorder %s185, 0
      %s188 = sadd.s32 %s187, 1
      %s189 = scalar_select %p186, %s187, %s188
      %p192 = pneg %p186
      %p193 = scmp.eq.s32.totalorder %s30, 1
      %p194 = por %p192, %p193
      %p195 = scmp.ne.s32.totalorder %s187, %s190
      %p196 = scmp.eq.s32.totalorder %s30, 0
      %p197 = por %p195, %p196
      %p198 = scmp.ne.s32.totalorder %s187, %s190
      %p199 = scmp.eq.s32.totalorder %s35, 1
      %p200 = por %p198, %p199
      %p201 = scmp.ne.s32.totalorder %s190, %s191
      %p202 = scmp.eq.s32.totalorder %s35, 0
      %p203 = por %p201, %p202
      %p204 = scmp.ne.s32.totalorder %s190, %s191
      %p205 = scmp.eq.s32.totalorder %s36, 1
      %p206 = por %p204, %p205
      %p208 = scmp.ne.s32.totalorder %s191, %s207
      %p209 = scmp.eq.s32.totalorder %s36, 0
      %p210 = por %p208, %p209
      %s211 = ssub.s32 %s30, %s37
      %p212 = scmp.eq.s32.totalorder %s211, 0
      %s214 = sadd.s32 %s213, 1
      %s215 = scalar_select %p212, %s213, %s214
      %p218 = pneg %p212
      %p219 = scmp.eq.s32.totalorder %s30, 1
      %p220 = por %p218, %p219
      %p221 = scmp.ne.s32.totalorder %s213, %s216
      %p222 = scmp.eq.s32.totalorder %s30, 0
      %p223 = por %p221, %p222
      %p224 = scmp.ne.s32.totalorder %s213, %s216
      %p225 = scmp.eq.s32.totalorder %s35, 1
      %p226 = por %p224, %p225
      %p227 = scmp.ne.s32.totalorder %s216, %s217
      %p228 = scmp.eq.s32.totalorder %s35, 0
      %p229 = por %p227, %p228
      %p230 = scmp.ne.s32.totalorder %s216, %s217
      %p231 = scmp.eq.s32.totalorder %s36, 1
      %p232 = por %p230, %p231
      %p234 = scmp.ne.s32.totalorder %s217, %s233
      %p235 = scmp.eq.s32.totalorder %s36, 0
      %p236 = por %p234, %p235
      %s237 = ssub.s32 %s30, %s37
      %p238 = scmp.eq.s32.totalorder %s237, 0
      %s240 = sadd.s32 %s239, 1
      %s241 = scalar_select %p238, %s239, %s240
      %p244 = pneg %p238
      %p245 = scmp.eq.s32.totalorder %s30, 1
      %p246 = por %p244, %p245
      %p247 = scmp.ne.s32.totalorder %s239, %s242
      %p248 = scmp.eq.s32.totalorder %s30, 0
      %p249 = por %p247, %p248
      %p250 = scmp.ne.s32.totalorder %s239, %s242
      %p251 = scmp.eq.s32.totalorder %s35, 1
      %p252 = por %p250, %p251
      %p253 = scmp.ne.s32.totalorder %s242, %s243
      %p254 = scmp.eq.s32.totalorder %s35, 0
      %p255 = por %p253, %p254
      %p256 = scmp.ne.s32.totalorder %s242, %s243
      %p257 = scmp.eq.s32.totalorder %s36, 1
      %p258 = por %p256, %p257
      %p260 = scmp.ne.s32.totalorder %s243, %s259
      %p261 = scmp.eq.s32.totalorder %s36, 0
      %p262 = por %p260, %p261
      %s263 = ssub.s32 %s30, %s37
      %p264 = scmp.eq.s32.totalorder %s263, 0
      %s266 = sadd.s32 %s265, 1
      %s267 = scalar_select %p264, %s265, %s266
      %p270 = pneg %p264
      %p271 = scmp.eq.s32.totalorder %s30, 1
      %p272 = por %p270, %p271
      %p273 = scmp.ne.s32.totalorder %s265, %s268
      %p274 = scmp.eq.s32.totalorder %s30, 0
      %p275 = por %p273, %p274
      %p276 = scmp.ne.s32.totalorder %s265, %s268
      %p277 = scmp.eq.s32.totalorder %s35, 1
      %p278 = por %p276, %p277
      %p279 = scmp.ne.s32.totalorder %s268, %s269
      %p280 = scmp.eq.s32.totalorder %s35, 0
      %p281 = por %p279, %p280
      %p282 = scmp.ne.s32.totalorder %s268, %s269
      %p283 = scmp.eq.s32.totalorder %s36, 1
      %p284 = por %p282, %p283
      %p286 = scmp.ne.s32.totalorder %s269, %s285
      %p287 = scmp.eq.s32.totalorder %s36, 0
      %p288 = por %p286, %p287
      %s289 = ssub.s32 %s30, %s37
      %p290 = scmp.eq.s32.totalorder %s289, 0
      %s292 = sadd.s32 %s291, 1
      %s293 = scalar_select %p290, %s291, %s292
      %p296 = pneg %p290
      %p297 = scmp.eq.s32.totalorder %s30, 1
      %p298 = por %p296, %p297
      %p299 = scmp.ne.s32.totalorder %s291, %s294
      %p300 = scmp.eq.s32.totalorder %s30, 0
      %p301 = por %p299, %p300
      %p302 = scmp.ne.s32.totalorder %s291, %s294
      %p303 = scmp.eq.s32.totalorder %s35, 1
      %p304 = por %p302, %p303
      %p305 = scmp.ne.s32.totalorder %s294, %s295
      %p306 = scmp.eq.s32.totalorder %s35, 0
      %p307 = por %p305, %p306
      %p308 = scmp.ne.s32.totalorder %s294, %s295
      %p309 = scmp.eq.s32.totalorder %s36, 1
      %p310 = por %p308, %p309
      %p312 = scmp.ne.s32.totalorder %s295, %s311
      %p313 = scmp.eq.s32.totalorder %s36, 0
      %p314 = por %p312, %p313
      %s315 = ssub.s32 %s30, %s37
      %p316 = scmp.eq.s32.totalorder %s315, 0
      %s318 = sadd.s32 %s317, 1
      %s319 = scalar_select %p316, %s317, %s318
      %p322 = pneg %p316
      %p323 = scmp.eq.s32.totalorder %s30, 1
      %p324 = por %p322, %p323
      %p325 = scmp.ne.s32.totalorder %s317, %s320
      %p326 = scmp.eq.s32.totalorder %s30, 0
      %p327 = por %p325, %p326
      %p328 = scmp.ne.s32.totalorder %s317, %s320
      %p329 = scmp.eq.s32.totalorder %s35, 1
      %p330 = por %p328, %p329
      %p331 = scmp.ne.s32.totalorder %s320, %s321
      %p332 = scmp.eq.s32.totalorder %s35, 0
      %p333 = por %p331, %p332
      %p334 = scmp.ne.s32.totalorder %s320, %s321
      %p335 = scmp.eq.s32.totalorder %s36, 1
      %p336 = por %p334, %p335
      %p338 = scmp.ne.s32.totalorder %s321, %s337
      %p339 = scmp.eq.s32.totalorder %s36, 0
      %p340 = por %p338, %p339
      %s341 = ssub.s32 %s30, %s37
      %p342 = scmp.eq.s32.totalorder %s341, 0
      %s344 = sadd.s32 %s343, 1
      %s345 = scalar_select %p342, %s343, %s344
      %p348 = pneg %p342
      %p349 = scmp.eq.s32.totalorder %s30, 1
      %p350 = por %p348, %p349
      %p351 = scmp.ne.s32.totalorder %s343, %s346
      %p352 = scmp.eq.s32.totalorder %s30, 0
      %p353 = por %p351, %p352
      %p354 = scmp.ne.s32.totalorder %s343, %s346
      %p355 = scmp.eq.s32.totalorder %s35, 1
      %p356 = por %p354, %p355
      %p357 = scmp.ne.s32.totalorder %s346, %s347
      %p358 = scmp.eq.s32.totalorder %s35, 0
      %p359 = por %p357, %p358
      %p360 = scmp.ne.s32.totalorder %s346, %s347
      %p361 = scmp.eq.s32.totalorder %s36, 1
      %p362 = por %p360, %p361
      %p364 = scmp.ne.s32.totalorder %s347, %s363
      %p365 = scmp.eq.s32.totalorder %s36, 0
      %p366 = por %p364, %p365
      %s367 = ssub.s32 %s30, %s37
      %p368 = scmp.eq.s32.totalorder %s367, 0
      %s370 = sadd.s32 %s369, 1
      %s371 = scalar_select %p368, %s369, %s370
      %p374 = pneg %p368
      %p375 = scmp.eq.s32.totalorder %s30, 1
      %p376 = por %p374, %p375
      %p377 = scmp.ne.s32.totalorder %s369, %s372
      %p378 = scmp.eq.s32.totalorder %s30, 0
      %p379 = por %p377, %p378
      %p380 = scmp.ne.s32.totalorder %s369, %s372
      %p381 = scmp.eq.s32.totalorder %s35, 1
      %p382 = por %p380, %p381
      %p383 = scmp.ne.s32.totalorder %s372, %s373
      %p384 = scmp.eq.s32.totalorder %s35, 0
      %p385 = por %p383, %p384
      %p386 = scmp.ne.s32.totalorder %s372, %s373
      %p387 = scmp.eq.s32.totalorder %s36, 1
      %p388 = por %p386, %p387
      %p390 = scmp.ne.s32.totalorder %s373, %s389
      %p391 = scmp.eq.s32.totalorder %s36, 0
      %p392 = por %p390, %p391
      %s393 = ssub.s32 %s30, %s37
      %p394 = scmp.eq.s32.totalorder %s393, 0
      %s396 = sadd.s32 %s395, 1
      %s397 = scalar_select %p394, %s395, %s396
      %p400 = pneg %p394
      %p401 = scmp.eq.s32.totalorder %s30, 1
      %p402 = por %p400, %p401
      %p403 = scmp.ne.s32.totalorder %s395, %s398
      %p404 = scmp.eq.s32.totalorder %s30, 0
      %p405 = por %p403, %p404
      %p406 = scmp.ne.s32.totalorder %s395, %s398
      %p407 = scmp.eq.s32.totalorder %s35, 1
      %p408 = por %p406, %p407
      %p409 = scmp.ne.s32.totalorder %s398, %s399
      %p410 = scmp.eq.s32.totalorder %s35, 0
      %p411 = por %p409, %p410
      %p412 = scmp.ne.s32.totalorder %s398, %s399
      %p413 = scmp.eq.s32.totalorder %s36, 1
      %p414 = por %p412, %p413
      %p416 = scmp.ne.s32.totalorder %s399, %s415
      %p417 = scmp.eq.s32.totalorder %s36, 0
      %p418 = por %p416, %p417
      %s419 = ssub.s32 %s30, %s37
      %p420 = scmp.eq.s32.totalorder %s419, 0
      %s422 = sadd.s32 %s421, 1
      %s423 = scalar_select %p420, %s421, %s422
      %p426 = pneg %p420
      %p427 = scmp.eq.s32.totalorder %s30, 1
      %p428 = por %p426, %p427
      %p429 = scmp.ne.s32.totalorder %s421, %s424
      %p430 = scmp.eq.s32.totalorder %s30, 0
      %p431 = por %p429, %p430
      %p432 = scmp.ne.s32.totalorder %s421, %s424
      %p433 = scmp.eq.s32.totalorder %s35, 1
      %p434 = por %p432, %p433
      %p435 = scmp.ne.s32.totalorder %s424, %s425
      %p436 = scmp.eq.s32.totalorder %s35, 0
      %p437 = por %p435, %p436
      %p438 = scmp.ne.s32.totalorder %s424, %s425
      %p439 = scmp.eq.s32.totalorder %s36, 1
      %p440 = por %p438, %p439
      %p442 = scmp.ne.s32.totalorder %s425, %s441
      %p443 = scmp.eq.s32.totalorder %s36, 0
      %p444 = por %p442, %p443
      %s445 = ssub.s32 %s30, %s37
      %p446 = scmp.eq.s32.totalorder %s445, 0
      %s448 = sadd.s32 %s447, 1
      %s449 = scalar_select %p446, %s447, %s448
      %p452 = pneg %p446
      %p453 = scmp.eq.s32.totalorder %s30, 1
      %p454 = por %p452, %p453
      %p455 = scmp.ne.s32.totalorder %s447, %s450
      %p456 = scmp.eq.s32.totalorder %s30, 0
      %p457 = por %p455, %p456
      %p458 = scmp.ne.s32.totalorder %s447, %s450
      %p459 = scmp.eq.s32.totalorder %s35, 1
      %p460 = por %p458, %p459
      %p461 = scmp.ne.s32.totalorder %s450, %s451
      %p462 = scmp.eq.s32.totalorder %s35, 0
      %p463 = por %p461, %p462
      %p464 = scmp.ne.s32.totalorder %s450, %s451
      %p465 = scmp.eq.s32.totalorder %s36, 1
      %p466 = por %p464, %p465
      %p468 = scmp.ne.s32.totalorder %s451, %s467
      %p469 = scmp.eq.s32.totalorder %s36, 0
      %p470 = por %p468, %p469
      %s471 = ssub.s32 %s30, %s37
      %p472 = scmp.eq.s32.totalorder %s471, 0
      %s474 = sadd.s32 %s473, 1
      %s475 = scalar_select %p472, %s473, %s474
      %p478 = pneg %p472
      %p479 = scmp.eq.s32.totalorder %s30, 1
      %p480 = por %p478, %p479
      %p481 = scmp.ne.s32.totalorder %s473, %s476
      %p482 = scmp.eq.s32.totalorder %s30, 0
      %p483 = por %p481, %p482
      %p484 = scmp.ne.s32.totalorder %s473, %s476
      %p485 = scmp.eq.s32.totalorder %s35, 1
      %p486 = por %p484, %p485
      %p487 = scmp.ne.s32.totalorder %s476, %s477
      %p488 = scmp.eq.s32.totalorder %s35, 0
      %p489 = por %p487, %p488
      %p490 = scmp.ne.s32.totalorder %s476, %s477
      %p491 = scmp.eq.s32.totalorder %s36, 1
      %p492 = por %p490, %p491
      %p494 = scmp.ne.s32.totalorder %s477, %s493
      %p495 = scmp.eq.s32.totalorder %s36, 0
      %p496 = por %p494, %p495
      %s498 = sadd.s32 %s497, 1
      %p501 = scmp.eq.s32.totalorder %s30, 1
      %p502 = scmp.ne.s32.totalorder %s497, %s499
      %p503 = scmp.eq.s32.totalorder %s30, 0
      %p504 = por %p502, %p503
      %p505 = scmp.ne.s32.totalorder %s497, %s499
      %p506 = scmp.eq.s32.totalorder %s35, 1
      %p507 = por %p505, %p506
      %p508 = scmp.ne.s32.totalorder %s499, %s500
      %p509 = scmp.eq.s32.totalorder %s35, 0
      %p510 = por %p508, %p509
      %p511 = scmp.ne.s32.totalorder %s499, %s500
      %p512 = scmp.eq.s32.totalorder %s36, 1
      %p513 = por %p511, %p512
      %p515 = scmp.ne.s32.totalorder %s500, %s514
      %p516 = scmp.eq.s32.totalorder %s36, 0
      %p517 = por %p515, %p516
      %p518 = scmp.le.s32.totalorder 1, %s30
      %p519 = scmp.lt.s32.totalorder %s30, 3
      %p520 = pnand %p518, %p519
      %p521 = pneg %p520
      // Predicated region
      $region9: #{tpu_custom_call.1} parent=5 // pred_check
        _
      $region10: #{tpu_custom_call.1} parent=5 // pred_check_branch
        %523 = sbr.rel (%p520) target = $region12
      $region11: #{tpu_custom_call.1} parent=5 // pred_region
        %s524 = ssub.s32 %s30, 1
        // Predicated region
        $region13: #{tpu_custom_call.1} parent=11 // pred_check
          %p525 = pneg %p51
        $region14: #{tpu_custom_call.1} parent=11 // pred_check_branch
          %527 = sbr.rel (%p525) target = $region16
        $region15: #{tpu_custom_call.1} parent=11 // pred_region
          %s529 = ssub.s32 256, 256
          %530 = vsyncadd [#allocation3], %s529
          %s531 = sshll.u32 [#allocation2], 4
          %s532 = int_to_ptr.vmem [resolvable:$true] %s531
          %537 = dma.hbm_to_vmem [thread:$0]  %s0, 256, %s532, [#allocation3], 128, 128, 8
        $region16: #{tpu_custom_call.1} parent=11 // pred_fallthru
          _
        // Predicated region
        $region17: #{tpu_custom_call.1} parent=11 // pred_check
          %p538 = pneg %p72
        $region18: #{tpu_custom_call.1} parent=11 // pred_check_branch
          %540 = sbr.rel (%p538) target = $region20
        $region19: #{tpu_custom_call.1} parent=11 // pred_region
          %s542 = ssub.s32 16, 16
          %543 = vsyncadd [#allocation6], %s542
          %s545 = sshll.u32 [#allocation5], 4
          %s546 = int_to_ptr.vmem [resolvable:$true] %s545
          %548 = dma.hbm_to_vmem [thread:$0]  %s1, 16, %s546, [#allocation6]
        $region20: #{tpu_custom_call.1} parent=11 // pred_fallthru
          _
        // Predicated region
        $region21: #{tpu_custom_call.1} parent=11 // pred_check
          %p549 = pneg %p93
        $region22: #{tpu_custom_call.1} parent=11 // pred_check_branch
          %551 = sbr.rel (%p549) target = $region24
        $region23: #{tpu_custom_call.1} parent=11 // pred_region
          %s553 = ssub.s32 16, 16
          %554 = vsyncadd [#allocation6], %s553
          %s556 = sshll.u32 [#allocation7], 4
          %s557 = int_to_ptr.vmem [resolvable:$true] %s556
          %559 = dma.hbm_to_vmem [thread:$0]  %s2, 16, %s557, [#allocation6]
        $region24: #{tpu_custom_call.1} parent=11 // pred_fallthru
          _
        // Predicated region
        $region25: #{tpu_custom_call.1} parent=11 // pred_check
          %p560 = pneg %p114
        $region26: #{tpu_custom_call.1} parent=11 // pred_check_branch
          %562 = sbr.rel (%p560) target = $region28
        $region27: #{tpu_custom_call.1} parent=11 // pred_region
          _
        $region28: #{tpu_custom_call.1} parent=11 // pred_fallthru
          _
        // Predicated region
        $region29: #{tpu_custom_call.1} parent=11 // pred_check
          %p563 = pneg %p135
        $region30: #{tpu_custom_call.1} parent=11 // pred_check_branch
          %565 = sbr.rel (%p563) target = $region32
        $region31: #{tpu_custom_call.1} parent=11 // pred_region
          %s567 = ssub.s32 16, 16
          %568 = vsyncadd [#allocation9], %s567
          %s570 = sshll.u32 [#allocation8], 4
          %s571 = int_to_ptr.vmem [resolvable:$true] %s570
          %573 = dma.hbm_to_vmem [thread:$0]  %s4, 16, %s571, [#allocation9]
        $region32: #{tpu_custom_call.1} parent=11 // pred_fallthru
          _
        // Predicated region
        $region33: #{tpu_custom_call.1} parent=11 // pred_check
          %p574 = pneg %p156
        $region34: #{tpu_custom_call.1} parent=11 // pred_check_branch
          %576 = sbr.rel (%p574) target = $region36
        $region35: #{tpu_custom_call.1} parent=11 // pred_region
          %s578 = ssub.s32 16, 16
          %579 = vsyncadd [#allocation9], %s578
          %s581 = sshll.u32 [#allocation10], 4
          %s582 = int_to_ptr.vmem [resolvable:$true] %s581
          %584 = dma.hbm_to_vmem [thread:$0]  %s5, 16, %s582, [#allocation9]
        $region36: #{tpu_custom_call.1} parent=11 // pred_fallthru
          _
        // Predicated region
        $region37: #{tpu_custom_call.1} parent=11 // pred_check
          %p585 = pneg %p177
        $region38: #{tpu_custom_call.1} parent=11 // pred_check_branch
          %587 = sbr.rel (%p585) target = $region40
        $region39: #{tpu_custom_call.1} parent=11 // pred_region
          %s589 = ssub.s32 16, 16
          %590 = vsyncadd [#allocation12], %s589
          %s592 = sshll.u32 [#allocation11], 4
          %s593 = int_to_ptr.vmem [resolvable:$true] %s592
          %595 = dma.hbm_to_vmem [thread:$0]  %s6, 16, %s593, [#allocation12]
        $region40: #{tpu_custom_call.1} parent=11 // pred_fallthru
          _
      $region12: #{tpu_custom_call.1} parent=5 // pred_fallthru
        _
      %p596 = scmp.lt.s32.totalorder %s30, 2
      // Predicated region
      $region41: #{tpu_custom_call.1} parent=5 // pred_check
        %p597 = pneg %p596
      $region42: #{tpu_custom_call.1} parent=5 // pred_check_branch
        %599 = sbr.rel (%p597) target = $region44
      $region43: #{tpu_custom_call.1} parent=5 // pred_region
        // Predicated region
        $region45: #{tpu_custom_call.1} parent=43 // pred_check
          %p600 = pneg %p197
        $region46: #{tpu_custom_call.1} parent=43 // pred_check_branch
          %602 = sbr.rel (%p600) target = $region48
        $region47: #{tpu_custom_call.1} parent=43 // pred_region
          %p603 = scmp.lt.s32.totalorder %s30, 1
          %s604 = scalar_select %p603, %s30, 1
          %s605 = smul.addr %s604, 4
          %s606 = smul.addr %s605, 4
          %s607 = scalar_lea.vmem %s7, %s606
        $region48: #{tpu_custom_call.1} parent=43 // pred_fallthru
          _
        // Predicated region
        $region49: #{tpu_custom_call.1} parent=43 // pred_check
          %p608 = pneg %p223
        $region50: #{tpu_custom_call.1} parent=43 // pred_check_branch
          %610 = sbr.rel (%p608) target = $region52
        $region51: #{tpu_custom_call.1} parent=43 // pred_region
          %p611 = scmp.lt.s32.totalorder %s30, 1
          %s612 = scalar_select %p611, %s30, 1
          %s613 = scalar_lea.vmem %s8, %s612
        $region52: #{tpu_custom_call.1} parent=43 // pred_fallthru
          _
        // Predicated region
        $region53: #{tpu_custom_call.1} parent=43 // pred_check
          %p614 = pneg %p249
        $region54: #{tpu_custom_call.1} parent=43 // pred_check_branch
          %616 = sbr.rel (%p614) target = $region56
        $region55: #{tpu_custom_call.1} parent=43 // pred_region
          %p617 = scmp.lt.s32.totalorder %s30, 1
          %s618 = scalar_select %p617, %s30, 1
          %s619 = smul.addr %s618, 4
          %s620 = smul.addr %s619, 4
          %s621 = scalar_lea.vmem %s9, %s620
        $region56: #{tpu_custom_call.1} parent=43 // pred_fallthru
          _
        // Predicated region
        $region57: #{tpu_custom_call.1} parent=43 // pred_check
          %p622 = pneg %p275
        $region58: #{tpu_custom_call.1} parent=43 // pred_check_branch
          %624 = sbr.rel (%p622) target = $region60
        $region59: #{tpu_custom_call.1} parent=43 // pred_region
          %p625 = scmp.lt.s32.totalorder %s30, 1
          %s626 = scalar_select %p625, %s30, 1
          %s627 = scalar_lea.vmem %s10, %s626
        $region60: #{tpu_custom_call.1} parent=43 // pred_fallthru
          _
        // Predicated region
        $region61: #{tpu_custom_call.1} parent=43 // pred_check
          %p628 = pneg %p301
        $region62: #{tpu_custom_call.1} parent=43 // pred_check_branch
          %630 = sbr.rel (%p628) target = $region64
        $region63: #{tpu_custom_call.1} parent=43 // pred_region
          %p631 = scmp.lt.s32.totalorder %s30, 1
          %s632 = scalar_select %p631, %s30, 1
          %s633 = scalar_lea.vmem %s11, %s632
        $region64: #{tpu_custom_call.1} parent=43 // pred_fallthru
          _
        // Predicated region
        $region65: #{tpu_custom_call.1} parent=43 // pred_check
          %p634 = pneg %p327
        $region66: #{tpu_custom_call.1} parent=43 // pred_check_branch
          %636 = sbr.rel (%p634) target = $region68
        $region67: #{tpu_custom_call.1} parent=43 // pred_region
          %p637 = scmp.lt.s32.totalorder %s30, 1
          %s638 = scalar_select %p637, %s30, 1
          %s639 = scalar_lea.vmem %s12, %s638
        $region68: #{tpu_custom_call.1} parent=43 // pred_fallthru
          _
        // Predicated region
        $region69: #{tpu_custom_call.1} parent=43 // pred_check
          %p640 = pneg %p353
        $region70: #{tpu_custom_call.1} parent=43 // pred_check_branch
          %642 = sbr.rel (%p640) target = $region72
        $region71: #{tpu_custom_call.1} parent=43 // pred_region
          %p643 = scmp.lt.s32.totalorder %s30, 1
          %s644 = scalar_select %p643, %s30, 1
          %s645 = smul.addr %s644, 4
          %s646 = smul.addr %s645, 4
          %s647 = scalar_lea.vmem %s13, %s646
        $region72: #{tpu_custom_call.1} parent=43 // pred_fallthru
          _
        // Predicated region
        $region73: #{tpu_custom_call.1} parent=43 // pred_check
          %p648 = pneg %p379
        $region74: #{tpu_custom_call.1} parent=43 // pred_check_branch
          %650 = sbr.rel (%p648) target = $region76
        $region75: #{tpu_custom_call.1} parent=43 // pred_region
          %p651 = scmp.lt.s32.totalorder %s30, 1
          %s652 = scalar_select %p651, %s30, 1
          %s653 = scalar_lea.vmem %s14, %s652
        $region76: #{tpu_custom_call.1} parent=43 // pred_fallthru
          _
        // Predicated region
        $region77: #{tpu_custom_call.1} parent=43 // pred_check
          %p654 = pneg %p405
        $region78: #{tpu_custom_call.1} parent=43 // pred_check_branch
          %656 = sbr.rel (%p654) target = $region80
        $region79: #{tpu_custom_call.1} parent=43 // pred_region
          %p657 = scmp.lt.s32.totalorder %s30, 1
          %s658 = scalar_select %p657, %s30, 1
          %s659 = smul.addr %s658, 8
          %s660 = smul.addr %s659, 4
          %s661 = scalar_lea.vmem %s15, %s660
        $region80: #{tpu_custom_call.1} parent=43 // pred_fallthru
          _
        // Predicated region
        $region81: #{tpu_custom_call.1} parent=43 // pred_check
          %p662 = pneg %p431
        $region82: #{tpu_custom_call.1} parent=43 // pred_check_branch
          %664 = sbr.rel (%p662) target = $region84
        $region83: #{tpu_custom_call.1} parent=43 // pred_region
          %p665 = scmp.lt.s32.totalorder %s30, 1
          %s666 = scalar_select %p665, %s30, 1
          %s667 = scalar_lea.vmem %s16, %s666
        $region84: #{tpu_custom_call.1} parent=43 // pred_fallthru
          _
        // Predicated region
        $region85: #{tpu_custom_call.1} parent=43 // pred_check
          %p668 = pneg %p457
        $region86: #{tpu_custom_call.1} parent=43 // pred_check_branch
          %670 = sbr.rel (%p668) target = $region88
        $region87: #{tpu_custom_call.1} parent=43 // pred_region
          %p671 = scmp.lt.s32.totalorder %s30, 1
          %s672 = scalar_select %p671, %s30, 1
          %s673 = scalar_lea.vmem %s17, %s672
        $region88: #{tpu_custom_call.1} parent=43 // pred_fallthru
          _
        // Predicated region
        $region89: #{tpu_custom_call.1} parent=43 // pred_check
          %p674 = pneg %p483
        $region90: #{tpu_custom_call.1} parent=43 // pred_check_branch
          %676 = sbr.rel (%p674) target = $region92
        $region91: #{tpu_custom_call.1} parent=43 // pred_region
          %p677 = scmp.lt.s32.totalorder %s30, 1
          %s678 = scalar_select %p677, %s30, 1
          %s679 = scalar_lea.vmem %s18, %s678
        $region92: #{tpu_custom_call.1} parent=43 // pred_fallthru
          _
      $region44: #{tpu_custom_call.1} parent=5 // pred_fallthru
        _
      %p680 = scmp.le.s32.totalorder 1, %s30
      %p681 = scmp.lt.s32.totalorder %s30, 3
      %p682 = pnand %p680, %p681
      %p683 = pneg %p682
      // Predicated region
      $region93: #{tpu_custom_call.1} parent=5 // pred_check
        _
      $region94: #{tpu_custom_call.1} parent=5 // pred_check_branch
        %685 = sbr.rel (%p682) target = $region96
      $region95: #{tpu_custom_call.1} parent=5 // pred_region
        %s686 = ssub.s32 %s30, 1
        // Predicated region
        $region97: #{tpu_custom_call.1} parent=95 // pred_check
          %p687 = pneg %p51
        $region98: #{tpu_custom_call.1} parent=95 // pred_check_branch
          %689 = sbr.rel (%p687) target = $region100
        $region99: #{tpu_custom_call.1} parent=95 // pred_region
          %690 = dma.done [#allocation3], 256
        $region100: #{tpu_custom_call.1} parent=95 // pred_fallthru
          _
        // Predicated region
        $region101: #{tpu_custom_call.1} parent=95 // pred_check
          %p691 = pneg %p72
        $region102: #{tpu_custom_call.1} parent=95 // pred_check_branch
          %693 = sbr.rel (%p691) target = $region104
        $region103: #{tpu_custom_call.1} parent=95 // pred_region
          %694 = dma.done [#allocation6], 16
        $region104: #{tpu_custom_call.1} parent=95 // pred_fallthru
          _
        // Predicated region
        $region105: #{tpu_custom_call.1} parent=95 // pred_check
          %p695 = pneg %p93
        $region106: #{tpu_custom_call.1} parent=95 // pred_check_branch
          %697 = sbr.rel (%p695) target = $region108
        $region107: #{tpu_custom_call.1} parent=95 // pred_region
          %698 = dma.done [#allocation6], 16
        $region108: #{tpu_custom_call.1} parent=95 // pred_fallthru
          _
        // Predicated region
        $region109: #{tpu_custom_call.1} parent=95 // pred_check
          %p699 = pneg %p135
        $region110: #{tpu_custom_call.1} parent=95 // pred_check_branch
          %701 = sbr.rel (%p699) target = $region112
        $region111: #{tpu_custom_call.1} parent=95 // pred_region
          %702 = dma.done [#allocation9], 16
        $region112: #{tpu_custom_call.1} parent=95 // pred_fallthru
          _
        // Predicated region
        $region113: #{tpu_custom_call.1} parent=95 // pred_check
          %p703 = pneg %p156
        $region114: #{tpu_custom_call.1} parent=95 // pred_check_branch
          %705 = sbr.rel (%p703) target = $region116
        $region115: #{tpu_custom_call.1} parent=95 // pred_region
          %706 = dma.done [#allocation9], 16
        $region116: #{tpu_custom_call.1} parent=95 // pred_fallthru
          _
        // Predicated region
        $region117: #{tpu_custom_call.1} parent=95 // pred_check
          %p707 = pneg %p177
        $region118: #{tpu_custom_call.1} parent=95 // pred_check_branch
          %709 = sbr.rel (%p707) target = $region120
        $region119: #{tpu_custom_call.1} parent=95 // pred_region
          %710 = dma.done [#allocation12], 16
        $region120: #{tpu_custom_call.1} parent=95 // pred_fallthru
          _
        %p711 = pneg %p51
        %p712 = pneg %p48
        %p713 = pneg %p72
        %p714 = pneg %p69
        %p715 = pneg %p93
        %p716 = pneg %p90
        %p717 = pneg %p114
        %p718 = pneg %p111
        %p719 = pneg %p135
        %p720 = pneg %p132
        %p721 = pneg %p156
        %p722 = pneg %p153
        %p723 = pneg %p177
        %p724 = pneg %p174
        %p725 = scmp.lt.s32.totalorder %s35, 1
        %s726 = scalar_select %p725, %s35, 1
        %s727 = smul.addr %s726, 4
        %s728 = smul.addr %s727, 4
        %s729 = scalar_lea.vmem %s7, %s728
        %p730 = pneg %p203
        %p731 = pneg %p200
        %p732 = scmp.lt.s32.totalorder %s35, 1
        %s733 = scalar_select %p732, %s35, 1
        %s734 = scalar_lea.vmem %s8, %s733
        %p735 = pneg %p229
        %p736 = pneg %p226
        %p737 = scmp.lt.s32.totalorder %s35, 1
        %s738 = scalar_select %p737, %s35, 1
        %s739 = smul.addr %s738, 4
        %s740 = smul.addr %s739, 4
        %s741 = scalar_lea.vmem %s9, %s740
        %p742 = pneg %p255
        %p743 = pneg %p252
        %p744 = scmp.lt.s32.totalorder %s35, 1
        %s745 = scalar_select %p744, %s35, 1
        %s746 = scalar_lea.vmem %s10, %s745
        %p747 = pneg %p281
        %p748 = pneg %p278
        %p749 = scmp.lt.s32.totalorder %s35, 1
        %s750 = scalar_select %p749, %s35, 1
        %s751 = scalar_lea.vmem %s11, %s750
        %p752 = pneg %p307
        %p753 = pneg %p304
        %p754 = scmp.lt.s32.totalorder %s35, 1
        %s755 = scalar_select %p754, %s35, 1
        %s756 = scalar_lea.vmem %s12, %s755
        %p757 = pneg %p333
        %p758 = pneg %p330
        %p759 = scmp.lt.s32.totalorder %s35, 1
        %s760 = scalar_select %p759, %s35, 1
        %s761 = smul.addr %s760, 4
        %s762 = smul.addr %s761, 4
        %s763 = scalar_lea.vmem %s13, %s762
        %p764 = pneg %p359
        %p765 = pneg %p356
        %p766 = scmp.lt.s32.totalorder %s35, 1
        %s767 = scalar_select %p766, %s35, 1
        %s768 = scalar_lea.vmem %s14, %s767
        %p769 = pneg %p385
        %p770 = pneg %p382
        %p771 = scmp.lt.s32.totalorder %s35, 1
        %s772 = scalar_select %p771, %s35, 1
        %s773 = smul.addr %s772, 8
        %s774 = smul.addr %s773, 4
        %s775 = scalar_lea.vmem %s15, %s774
        %p776 = pneg %p411
        %p777 = pneg %p408
        %p778 = scmp.lt.s32.totalorder %s35, 1
        %s779 = scalar_select %p778, %s35, 1
        %s780 = scalar_lea.vmem %s16, %s779
        %p781 = pneg %p437
        %p782 = pneg %p434
        %p783 = scmp.lt.s32.totalorder %s35, 1
        %s784 = scalar_select %p783, %s35, 1
        %s785 = scalar_lea.vmem %s17, %s784
        %p786 = pneg %p463
        %p787 = pneg %p460
        %p788 = scmp.lt.s32.totalorder %s35, 1
        %s789 = scalar_select %p788, %s35, 1
        %s790 = scalar_lea.vmem %s18, %s789
        %p791 = pneg %p489
        %p792 = pneg %p486
        %p793 = pneg %p510
        %p794 = pneg %p507
        %p795 = scmp.lt.s32.totalorder %s35, 1
        %s796 = scalar_select %p795, %s35, 1
        %s797 = smul.addr %s796, 4
        %s798 = smul.addr %s797, 4
        %s799 = scalar_lea.vmem %s7, %s798
        %p800 = scmp.lt.s32.totalorder %s35, 1
        %s801 = scalar_select %p800, %s35, 1
        %s802 = scalar_lea.vmem %s8, %s801
        %p803 = scmp.lt.s32.totalorder %s35, 1
        %s804 = scalar_select %p803, %s35, 1
        %s805 = smul.addr %s804, 4
        %s806 = smul.addr %s805, 4
        %s807 = scalar_lea.vmem %s9, %s806
        %p808 = scmp.lt.s32.totalorder %s35, 1
        %s809 = scalar_select %p808, %s35, 1
        %s810 = scalar_lea.vmem %s10, %s809
        %p811 = scmp.lt.s32.totalorder %s35, 1
        %s812 = scalar_select %p811, %s35, 1
        %s813 = scalar_lea.vmem %s11, %s812
        %p814 = scmp.lt.s32.totalorder %s35, 1
        %s815 = scalar_select %p814, %s35, 1
        %s816 = scalar_lea.vmem %s12, %s815
        %p817 = scmp.lt.s32.totalorder %s35, 1
        %s818 = scalar_select %p817, %s35, 1
        %s819 = smul.addr %s818, 4
        %s820 = smul.addr %s819, 4
        %s821 = scalar_lea.vmem %s13, %s820
        %p822 = scmp.lt.s32.totalorder %s35, 1
        %s823 = scalar_select %p822, %s35, 1
        %s824 = scalar_lea.vmem %s14, %s823
        %p825 = scmp.lt.s32.totalorder %s35, 1
        %s826 = scalar_select %p825, %s35, 1
        %s827 = smul.addr %s826, 8
        %s828 = smul.addr %s827, 4
        %s829 = scalar_lea.vmem %s15, %s828
        %p830 = scmp.lt.s32.totalorder %s35, 1
        %s831 = scalar_select %p830, %s35, 1
        %s832 = scalar_lea.vmem %s16, %s831
        %p833 = scmp.lt.s32.totalorder %s35, 1
        %s834 = scalar_select %p833, %s35, 1
        %s835 = scalar_lea.vmem %s17, %s834
        %p836 = scmp.lt.s32.totalorder %s35, 1
        %s837 = scalar_select %p836, %s35, 1
        %s838 = scalar_lea.vmem %s18, %s837
        %p840 = scmp.eq.s32.totalorder %s35, 0
        // Predicated region
        $region121: #{tpu_custom_call.1} parent=95 // pred_check
          %p841 = pneg %p840
        $region122: #{tpu_custom_call.1} parent=95 // pred_check_branch
          %843 = sbr.rel (%p841) target = $region124
        $region123: #{tpu_custom_call.1} parent=95 // pred_region
          %v844 = vld [vmem:[#allocation2] sm:$0xff]
          %v845 = vld [vmem:[#allocation2 + $0x8] sm:$0xff]
          %vm846 = vcmask 130048
          %v847 = vsel %vm846, %v844, 0.0
          %v848 = vsel %vm846, %v845, 0.0
          %v849 = vadd.f32 %v847, %v848
          %v850 = vrot.slane %v849, 4
          %v851 = vadd.f32 %v849, %v850
          %v852 = vrot.slane %v851, 2
          %v853 = vadd.f32 %v851, %v852
          %v854 = vrot.slane %v853, 1
          %v855 = vadd.f32 %v853, %v854
          %v856 = vrcp.pop 16.0
          %v857 = vmul.f32 %v855, %v856
          %v858 = vsub.f32 %v844, %v857
          %v859 = vsub.f32 %v845, %v857
          %v860 = vmul.f32 %v858, %v858
          %v861 = vmul.f32 %v859, %v859
          %v862 = vsel %vm846, %v860, 0.0
          %v863 = vsel %vm846, %v861, 0.0
          %v864 = vadd.f32 %v862, %v863
          %v865 = vrot.slane %v864, 4
          %v866 = vadd.f32 %v864, %v865
          %v867 = vrot.slane %v866, 2
          %v868 = vadd.f32 %v866, %v867
          %v869 = vrot.slane %v868, 1
          %v870 = vadd.f32 %v868, %v869
          %v871 = vmul.f32 %v870, %v856
          %v872 = vadd.f32 %v871, 1e-05
          %v873 = vrsqrt.pop %v872
          %v874 = vmul.f32 %v858, %v873
          %v875 = vmul.f32 %v859, %v873
          %v876 = vld [vmem:[#allocation5] sm:$0x1]
          %v878 = vlaneseq
          %v879 = vshrl.u32 %v878, 7
          %v880 = vsub.s32 0, %v879
          %v881 = vrot.slane %v876, %v880
          %v883 = vmul.f32 %v874, %v881
          %v884 = vmul.f32 %v875, %v881
          %v885 = vld [vmem:[#allocation7] sm:$0x1]
          %v887 = vlaneseq
          %v888 = vshrl.u32 %v887, 7
          %v889 = vsub.s32 0, %v888
          %v890 = vrot.slane %v885, %v889
          %v892 = vadd.f32 %v883, %v890
          %v893 = vadd.f32 %v884, %v890
          %v894 = vpack.c.bf16 %v893, %v892
          %v895 = vld [vmem:[%s3] sm:$0xf]
          %v896 = vld [vmem:[%s3 + $0x4] sm:$0xf]
          %v897 = vld [vmem:[#allocation8] sm:$0x1]
          %v899 = vlaneseq
          %v900 = vshrl.u32 %v899, 7
          %v901 = vsub.s32 0, %v900
          %v902 = vrot.slane %v897, %v901
          %v906 = vunpack.c.l.b16 %v895
          %v907 = vunpack.c.l.b16 %v896
          %v908 = vpack.c.b16 %v907, %v906
          %v911 = vsel %vm846, %v894, 0
          %913 = vmatprep.subr.bf16.mxu0 0
          %914 = vmatpush1.bf16.msra.mxu0 %v908
          %915 = vmatprep.subr.bf16.mxu0 0
          %916 = vmatpush1.bf16.msra.mxu0 0
          %917 = vmatprep.subr.bf16.mxu0 0
          %918 = vmatpush1.bf16.msra.mxu0 0
          %919 = vmatprep.subr.bf16.mxu0 0
          %920 = vmatpush1.bf16.msra.mxu0 0
          %921 = vmatprep.subr.bf16.mxu0 0
          %922 = vmatpush1.bf16.msra.mxu0 0
          %923 = vmatprep.subr.bf16.mxu0 0
          %924 = vmatpush1.bf16.msra.mxu0 0
          %925 = vmatprep.subr.bf16.mxu0 0
          %926 = vmatpush1.bf16.msra.mxu0 0
          %927 = vmatprep.subr.bf16.mxu0 0
          %928 = vmatpush1.bf16.msra.mxu0 0
          %929 = vmatprep.subr.bf16.mxu0 0
          %930 = vmatpush1.bf16.msra.mxu0 0
          %931 = vmatprep.subr.bf16.mxu0 0
          %932 = vmatpush1.bf16.msra.mxu0 0
          %933 = vmatprep.subr.bf16.mxu0 0
          %934 = vmatpush1.bf16.msra.mxu0 0
          %935 = vmatprep.subr.bf16.mxu0 0
          %936 = vmatpush1.bf16.msra.mxu0 0
          %937 = vmatprep.subr.bf16.mxu0 0
          %938 = vmatpush1.bf16.msra.mxu0 0
          %939 = vmatprep.subr.bf16.mxu0 0
          %940 = vmatpush1.bf16.msra.mxu0 0
          %941 = vmatprep.subr.bf16.mxu0 0
          %942 = vmatpush1.bf16.msra.mxu0 0
          %943 = vmatprep.subr.bf16.mxu0 0
          %944 = vmatpush1.bf16.msra.mxu0 0
          %945 = vmatprep.mubr.bf16.mxu0 0
          %946 = vmatmul.mubr.bf16.gmra.mrb[0].mxu0 %v911
          %v947 = vpop.f32.mrb[0].mxu0
          %v948 = vadd.f32 %v902, %v947
          %v949 = vpop.f32.mrb[0].mxu0
          %v950 = vpop.f32.mrb[0].mxu0
          %v951 = vadd.f32 %v902, %v950
          %v952 = vpop.f32.mrb[0].mxu0
          %953 = vdwg.mxu0
          %vm954 = vcmask 261120
          %v955 = vsel %vm954, %v948, 0.0
          %956 = vadd.xlane.f32.xlu0 %v955
          %v957 = vpop.xlane.xlu0 %956
          %v958 = vsel %vm954, %v951, 0.0
          %959 = vadd.xlane.f32.xlu0 %v958
          %v960 = vpop.xlane.xlu0 %959
          %v961 = vrcp.pop 32.0
          %v962 = vmul.f32 %v957, %v961
          %v963 = vmul.f32 %v960, %v961
          %v964 = vsub.f32 %v948, %v962
          %v965 = vsub.f32 %v951, %v963
          %v966 = vmul.f32 %v964, %v964
          %v967 = vmul.f32 %v965, %v965
          %v968 = vsel %vm954, %v966, 0.0
          %969 = vadd.xlane.f32.xlu0 %v968
          %v970 = vpop.xlane.xlu0 %969
          %v971 = vsel %vm954, %v967, 0.0
          %972 = vadd.xlane.f32.xlu0 %v971
          %v973 = vpop.xlane.xlu0 %972
          %v974 = vmul.f32 %v970, %v961
          %v975 = vmul.f32 %v973, %v961
          %v976 = vadd.f32 %v974, 1e-05
          %v977 = vadd.f32 %v975, 1e-05
          %v978 = vrsqrt.pop %v976
          %v979 = vrsqrt.pop %v977
          %v980 = vmul.f32 %v964, %v978
          %v981 = vmul.f32 %v965, %v979
          %v982 = vld [vmem:[#allocation10] sm:$0x1]
          %v984 = vlaneseq
          %v985 = vshrl.u32 %v984, 7
          %v986 = vsub.s32 0, %v985
          %v987 = vrot.slane %v982, %v986
          %v989 = vmul.f32 %v980, %v987
          %v990 = vmul.f32 %v981, %v987
          %v991 = vld [vmem:[#allocation11] sm:$0x1]
          %v993 = vlaneseq
          %v994 = vshrl.u32 %v993, 7
          %v995 = vsub.s32 0, %v994
          %v996 = vrot.slane %v991, %v995
          %v998 = vadd.f32 %v989, %v996
          %v999 = vadd.f32 %v990, %v996
          %1000 = vst.msk [vmem:[#allocation13] sm:$0xff] %vm954, %v998
          %1001 = vst.msk [vmem:[#allocation13 + $0x8] sm:$0xff] %vm954, %v999
        $region124: #{tpu_custom_call.1} parent=95 // pred_fallthru
          _
        %v1002 = vld [vmem:[#allocation13] sm:$0xff]
        %v1003 = vld [vmem:[#allocation13 + $0x8] sm:$0xff]
        %v1004 = vpack.c.bf16 %v1003, %v1002
        %v1005 = vld [vmem:[%s799] sm:$0xf]
        %v1006 = vld [vmem:[%s799 + $0x4] sm:$0xf]
        %v1007 = vld [vmem:[%s799 + $0x8] sm:$0xf]
        %v1008 = vld [vmem:[%s799 + $0xc] sm:$0xf]
        %v1009 = vld [vmem:[%s802] sm:$0x1]
        %v1011 = vlaneseq
        %v1012 = vshrl.u32 %v1011, 7
        %v1013 = vsub.s32 0, %v1012
        %v1014 = vrot.slane %v1009, %v1013
        %v1020 = vunpack.c.l.b16 %v1005
        %v1021 = vunpack.c.l.b16 %v1006
        %v1022 = vunpack.c.l.b16 %v1007
        %v1023 = vunpack.c.l.b16 %v1008
        %v1024 = vpack.c.b16 %v1021, %v1020
        %v1025 = vpack.c.b16 %v1023, %v1022
        %vm1028 = vcmask 261120
        %v1030 = vsel %vm1028, %v1004, 0
        %1032 = vmatprep.subr.bf16.mxu0 0
        %1033 = vmatpush1.bf16.msra.mxu0 %v1024
        %1034 = vmatprep.subr.bf16.mxu0 0
        %1035 = vmatpush1.bf16.msra.mxu0 %v1025
        %1036 = vmatprep.subr.bf16.mxu0 0
        %1037 = vmatpush1.bf16.msra.mxu0 0
        %1038 = vmatprep.subr.bf16.mxu0 0
        %1039 = vmatpush1.bf16.msra.mxu0 0
        %1040 = vmatprep.subr.bf16.mxu0 0
        %1041 = vmatpush1.bf16.msra.mxu0 0
        %1042 = vmatprep.subr.bf16.mxu0 0
        %1043 = vmatpush1.bf16.msra.mxu0 0
        %1044 = vmatprep.subr.bf16.mxu0 0
        %1045 = vmatpush1.bf16.msra.mxu0 0
        %1046 = vmatprep.subr.bf16.mxu0 0
        %1047 = vmatpush1.bf16.msra.mxu0 0
        %1048 = vmatprep.subr.bf16.mxu0 0
        %1049 = vmatpush1.bf16.msra.mxu0 0
        %1050 = vmatprep.subr.bf16.mxu0 0
        %1051 = vmatpush1.bf16.msra.mxu0 0
        %1052 = vmatprep.subr.bf16.mxu0 0
        %1053 = vmatpush1.bf16.msra.mxu0 0
        %1054 = vmatprep.subr.bf16.mxu0 0
        %1055 = vmatpush1.bf16.msra.mxu0 0
        %1056 = vmatprep.subr.bf16.mxu0 0
        %1057 = vmatpush1.bf16.msra.mxu0 0
        %1058 = vmatprep.subr.bf16.mxu0 0
        %1059 = vmatpush1.bf16.msra.mxu0 0
        %1060 = vmatprep.subr.bf16.mxu0 0
        %1061 = vmatpush1.bf16.msra.mxu0 0
        %1062 = vmatprep.subr.bf16.mxu0 0
        %1063 = vmatpush1.bf16.msra.mxu0 0
        %1064 = vmatprep.mubr.bf16.mxu0 0
        %1065 = vmatmul.mubr.bf16.gmra.mrb[0].mxu0 %v1030
        %v1066 = vpop.f32.mrb[0].mxu0
        %v1067 = vadd.f32 %v1014, %v1066
        %v1068 = vpop.f32.mrb[0].mxu0
        %v1069 = vpop.f32.mrb[0].mxu0
        %v1070 = vadd.f32 %v1014, %v1069
        %v1071 = vpop.f32.mrb[0].mxu0
        %1072 = vdwg.mxu0
        %v1073 = vmul.f32 %v1067, 0.35355338
        %v1074 = vmul.f32 %v1070, 0.35355338
        %1077 = vrot.lane.b32.xlu0 %v1073, 120
        %v1078 = vpop.permute.xlu0 %1077
        %1079 = vrot.lane.b32.xlu0 %v1074, 120
        %v1080 = vpop.permute.xlu0 %1079
        %1083 = vrot.lane.b32.xlu0 %v1073, 112
        %v1084 = vpop.permute.xlu0 %1083
        %1085 = vrot.lane.b32.xlu0 %v1074, 112
        %v1086 = vpop.permute.xlu0 %1085
        %1089 = vrot.lane.b32.xlu0 %v1073, 104
        %v1090 = vpop.permute.xlu0 %1089
        %1091 = vrot.lane.b32.xlu0 %v1074, 104
        %v1092 = vpop.permute.xlu0 %1091
        %v1095 = vpack.c.bf16 %v1073, %v1073
        %v1096 = vpack.c.bf16 %v1074, %v1074
        %v1097 = vpack.c.bf16 %v1078, %v1078
        %v1098 = vpack.c.bf16 %v1080, %v1080
        %v1099 = vpack.c.bf16 %v1084, %v1084
        %v1100 = vpack.c.bf16 %v1086, %v1086
        %v1101 = vpack.c.bf16 %v1090, %v1090
        %v1102 = vpack.c.bf16 %v1092, %v1092
        %1105 = vrot.lane.b32.xlu0 %v1067, 120
        %v1106 = vpop.permute.xlu0 %1105
        %1107 = vrot.lane.b32.xlu0 %v1070, 120
        %v1108 = vpop.permute.xlu0 %1107
        %1111 = vrot.lane.b32.xlu0 %v1067, 112
        %v1112 = vpop.permute.xlu0 %1111
        %1113 = vrot.lane.b32.xlu0 %v1070, 112
        %v1114 = vpop.permute.xlu0 %1113
        %1117 = vrot.lane.b32.xlu0 %v1067, 104
        %v1118 = vpop.permute.xlu0 %1117
        %1119 = vrot.lane.b32.xlu0 %v1070, 104
        %v1120 = vpop.permute.xlu0 %1119
        %v1123 = vpack.c.bf16 %v1067, %v1067
        %v1124 = vpack.c.bf16 %v1070, %v1070
        %v1125 = vpack.c.bf16 %v1106, %v1106
        %v1126 = vpack.c.bf16 %v1108, %v1108
        %v1127 = vpack.c.bf16 %v1112, %v1112
        %v1128 = vpack.c.bf16 %v1114, %v1114
        %v1129 = vpack.c.bf16 %v1118, %v1118
        %v1130 = vpack.c.bf16 %v1120, %v1120
        %1132 = vrot.lane.b32.xlu0 %v1123, 96
        %v1133 = vpop.permute.xlu0 %1132
        %vm1134 = vcmask 64512
        %v1136 = vsel %vm1134, %v1095, 0
        %v1139 = vsel %vm1134, %v1133, 0
        %1141 = vmatprep.subr.bf16.mxu0 0
        %1142 = vmatpush1.bf16.xpose.msra.mxu0 %v1139
        %1143 = vmatprep.subr.bf16.mxu0 0
        %1144 = vmatpush1.bf16.xpose.msra.mxu0 0
        %1145 = vmatprep.subr.bf16.mxu0 0
        %1146 = vmatpush1.bf16.xpose.msra.mxu0 0
        %1147 = vmatprep.subr.bf16.mxu0 0
        %1148 = vmatpush1.bf16.xpose.msra.mxu0 0
        %1149 = vmatprep.subr.bf16.mxu0 0
        %1150 = vmatpush1.bf16.xpose.msra.mxu0 0
        %1151 = vmatprep.subr.bf16.mxu0 0
        %1152 = vmatpush1.bf16.xpose.msra.mxu0 0
        %1153 = vmatprep.subr.bf16.mxu0 0
        %1154 = vmatpush1.bf16.xpose.msra.mxu0 0
        %1155 = vmatprep.subr.bf16.mxu0 0
        %1156 = vmatpush1.bf16.xpose.msra.mxu0 0
        %1157 = vmatprep.subr.bf16.mxu0 0
        %1158 = vmatpush1.bf16.xpose.msra.mxu0 0
        %1159 = vmatprep.subr.bf16.mxu0 0
        %1160 = vmatpush1.bf16.xpose.msra.mxu0 0
        %1161 = vmatprep.subr.bf16.mxu0 0
        %1162 = vmatpush1.bf16.xpose.msra.mxu0 0
        %1163 = vmatprep.subr.bf16.mxu0 0
        %1164 = vmatpush1.bf16.xpose.msra.mxu0 0
        %1165 = vmatprep.subr.bf16.mxu0 0
        %1166 = vmatpush1.bf16.xpose.msra.mxu0 0
        %1167 = vmatprep.subr.bf16.mxu0 0
        %1168 = vmatpush1.bf16.xpose.msra.mxu0 0
        %1169 = vmatprep.subr.bf16.mxu0 0
        %1170 = vmatpush1.bf16.xpose.msra.mxu0 0
        %1171 = vmatprep.subr.bf16.mxu0 0
        %1172 = vmatpush1.bf16.xpose.msra.mxu0 0
        %1173 = vmatprep.mubr.bf16.mxu0 0
        %1174 = vmatmul.mubr.bf16.gmra.mrb[0].mxu0 %v1136
        %v1175 = vpop.f32.mrb[0].mxu0
        %v1176 = vadd.f32 0.0, %v1175
        %v1177 = vpop.f32.mrb[0].mxu0
        %v1178 = vpop.f32.mrb[0].mxu0
        %v1179 = vpop.f32.mrb[0].mxu0
        %1180 = vdwg.mxu0
        %1182 = vrot.lane.b32.xlu0 %v1124, 96
        %v1183 = vpop.permute.xlu0 %1182
        %v1185 = vsel %vm1134, %v1096, 0
        %v1188 = vsel %vm1134, %v1183, 0
        %1190 = vmatprep.subr.bf16.mxu0 0
        %1191 = vmatpush1.bf16.xpose.msra.mxu0 %v1188
        %1192 = vmatprep.subr.bf16.mxu0 0
        %1193 = vmatpush1.bf16.xpose.msra.mxu0 0
        %1194 = vmatprep.subr.bf16.mxu0 0
        %1195 = vmatpush1.bf16.xpose.msra.mxu0 0
        %1196 = vmatprep.subr.bf16.mxu0 0
        %1197 = vmatpush1.bf16.xpose.msra.mxu0 0
        %1198 = vmatprep.subr.bf16.mxu0 0
        %1199 = vmatpush1.bf16.xpose.msra.mxu0 0
        %1200 = vmatprep.subr.bf16.mxu0 0
        %1201 = vmatpush1.bf16.xpose.msra.mxu0 0
        %1202 = vmatprep.subr.bf16.mxu0 0
        %1203 = vmatpush1.bf16.xpose.msra.mxu0 0
        %1204 = vmatprep.subr.bf16.mxu0 0
        %1205 = vmatpush1.bf16.xpose.msra.mxu0 0
        %1206 = vmatprep.subr.bf16.mxu0 0
        %1207 = vmatpush1.bf16.xpose.msra.mxu0 0
        %1208 = vmatprep.subr.bf16.mxu0 0
        %1209 = vmatpush1.bf16.xpose.msra.mxu0 0
        %1210 = vmatprep.subr.bf16.mxu0 0
        %1211 = vmatpush1.bf16.xpose.msra.mxu0 0
        %1212 = vmatprep.subr.bf16.mxu0 0
        %1213 = vmatpush1.bf16.xpose.msra.mxu0 0
        %1214 = vmatprep.subr.bf16.mxu0 0
        %1215 = vmatpush1.bf16.xpose.msra.mxu0 0
        %1216 = vmatprep.subr.bf16.mxu0 0
        %1217 = vmatpush1.bf16.xpose.msra.mxu0 0
        %1218 = vmatprep.subr.bf16.mxu0 0
        %1219 = vmatpush1.bf16.xpose.msra.mxu0 0
        %1220 = vmatprep.subr.bf16.mxu0 0
        %1221 = vmatpush1.bf16.xpose.msra.mxu0 0
        %1222 = vmatprep.mubr.bf16.mxu0 0
        %1223 = vmatmul.mubr.bf16.gmra.mrb[0].mxu0 %v1185
        %v1224 = vpop.f32.mrb[0].mxu0
        %v1225 = vadd.f32 0.0, %v1224
        %v1226 = vpop.f32.mrb[0].mxu0
        %v1227 = vpop.f32.mrb[0].mxu0
        %v1228 = vpop.f32.mrb[0].mxu0
        %1229 = vdwg.mxu0
        %1231 = vrot.lane.b32.xlu0 %v1125, 96
        %v1232 = vpop.permute.xlu0 %1231
        %v1234 = vsel %vm1134, %v1097, 0
        %v1237 = vsel %vm1134, %v1232, 0
        %1239 = vmatprep.subr.bf16.mxu0 0
        %1240 = vmatpush1.bf16.xpose.msra.mxu0 %v1237
        %1241 = vmatprep.subr.bf16.mxu0 0
        %1242 = vmatpush1.bf16.xpose.msra.mxu0 0
        %1243 = vmatprep.subr.bf16.mxu0 0
        %1244 = vmatpush1.bf16.xpose.msra.mxu0 0
        %1245 = vmatprep.subr.bf16.mxu0 0
        %1246 = vmatpush1.bf16.xpose.msra.mxu0 0
        %1247 = vmatprep.subr.bf16.mxu0 0
        %1248 = vmatpush1.bf16.xpose.msra.mxu0 0
        %1249 = vmatprep.subr.bf16.mxu0 0
        %1250 = vmatpush1.bf16.xpose.msra.mxu0 0
        %1251 = vmatprep.subr.bf16.mxu0 0
        %1252 = vmatpush1.bf16.xpose.msra.mxu0 0
        %1253 = vmatprep.subr.bf16.mxu0 0
        %1254 = vmatpush1.bf16.xpose.msra.mxu0 0
        %1255 = vmatprep.subr.bf16.mxu0 0
        %1256 = vmatpush1.bf16.xpose.msra.mxu0 0
        %1257 = vmatprep.subr.bf16.mxu0 0
        %1258 = vmatpush1.bf16.xpose.msra.mxu0 0
        %1259 = vmatprep.subr.bf16.mxu0 0
        %1260 = vmatpush1.bf16.xpose.msra.mxu0 0
        %1261 = vmatprep.subr.bf16.mxu0 0
        %1262 = vmatpush1.bf16.xpose.msra.mxu0 0
        %1263 = vmatprep.subr.bf16.mxu0 0
        %1264 = vmatpush1.bf16.xpose.msra.mxu0 0
        %1265 = vmatprep.subr.bf16.mxu0 0
        %1266 = vmatpush1.bf16.xpose.msra.mxu0 0
        %1267 = vmatprep.subr.bf16.mxu0 0
        %1268 = vmatpush1.bf16.xpose.msra.mxu0 0
        %1269 = vmatprep.subr.bf16.mxu0 0
        %1270 = vmatpush1.bf16.xpose.msra.mxu0 0
        %1271 = vmatprep.mubr.bf16.mxu0 0
        %1272 = vmatmul.mubr.bf16.gmra.mrb[0].mxu0 %v1234
        %v1273 = vpop.f32.mrb[0].mxu0
        %v1274 = vadd.f32 0.0, %v1273
        %v1275 = vpop.f32.mrb[0].mxu0
        %v1276 = vpop.f32.mrb[0].mxu0
        %v1277 = vpop.f32.mrb[0].mxu0
        %1278 = vdwg.mxu0
        %1280 = vrot.lane.b32.xlu0 %v1126, 96
        %v1281 = vpop.permute.xlu0 %1280
        %v1283 = vsel %vm1134, %v1098, 0
        %v1286 = vsel %vm1134, %v1281, 0
        %1288 = vmatprep.subr.bf16.mxu0 0
        %1289 = vmatpush1.bf16.xpose.msra.mxu0 %v1286
        %1290 = vmatprep.subr.bf16.mxu0 0
        %1291 = vmatpush1.bf16.xpose.msra.mxu0 0
        %1292 = vmatprep.subr.bf16.mxu0 0
        %1293 = vmatpush1.bf16.xpose.msra.mxu0 0
        %1294 = vmatprep.subr.bf16.mxu0 0
        %1295 = vmatpush1.bf16.xpose.msra.mxu0 0
        %1296 = vmatprep.subr.bf16.mxu0 0
        %1297 = vmatpush1.bf16.xpose.msra.mxu0 0
        %1298 = vmatprep.subr.bf16.mxu0 0
        %1299 = vmatpush1.bf16.xpose.msra.mxu0 0
        %1300 = vmatprep.subr.bf16.mxu0 0
        %1301 = vmatpush1.bf16.xpose.msra.mxu0 0
        %1302 = vmatprep.subr.bf16.mxu0 0
        %1303 = vmatpush1.bf16.xpose.msra.mxu0 0
        %1304 = vmatprep.subr.bf16.mxu0 0
        %1305 = vmatpush1.bf16.xpose.msra.mxu0 0
        %1306 = vmatprep.subr.bf16.mxu0 0
        %1307 = vmatpush1.bf16.xpose.msra.mxu0 0
        %1308 = vmatprep.subr.bf16.mxu0 0
        %1309 = vmatpush1.bf16.xpose.msra.mxu0 0
        %1310 = vmatprep.subr.bf16.mxu0 0
        %1311 = vmatpush1.bf16.xpose.msra.mxu0 0
        %1312 = vmatprep.subr.bf16.mxu0 0
        %1313 = vmatpush1.bf16.xpose.msra.mxu0 0
        %1314 = vmatprep.subr.bf16.mxu0 0
        %1315 = vmatpush1.bf16.xpose.msra.mxu0 0
        %1316 = vmatprep.subr.bf16.mxu0 0
        %1317 = vmatpush1.bf16.xpose.msra.mxu0 0
        %1318 = vmatprep.subr.bf16.mxu0 0
        %1319 = vmatpush1.bf16.xpose.msra.mxu0 0
        %1320 = vmatprep.mubr.bf16.mxu0 0
        %1321 = vmatmul.mubr.bf16.gmra.mrb[0].mxu0 %v1283
        %v1322 = vpop.f32.mrb[0].mxu0
        %v1323 = vadd.f32 0.0, %v1322
        %v1324 = vpop.f32.mrb[0].mxu0
        %v1325 = vpop.f32.mrb[0].mxu0
        %v1326 = vpop.f32.mrb[0].mxu0
        %1327 = vdwg.mxu0
        %1329 = vrot.lane.b32.xlu0 %v1127, 96
        %v1330 = vpop.permute.xlu0 %1329
        %v1332 = vsel %vm1134, %v1099, 0
        %v1335 = vsel %vm1134, %v1330, 0
        %1337 = vmatprep.subr.bf16.mxu0 0
        %1338 = vmatpush1.bf16.xpose.msra.mxu0 %v1335
        %1339 = vmatprep.subr.bf16.mxu0 0
        %1340 = vmatpush1.bf16.xpose.msra.mxu0 0
        %1341 = vmatprep.subr.bf16.mxu0 0
        %1342 = vmatpush1.bf16.xpose.msra.mxu0 0
        %1343 = vmatprep.subr.bf16.mxu0 0
        %1344 = vmatpush1.bf16.xpose.msra.mxu0 0
        %1345 = vmatprep.subr.bf16.mxu0 0
        %1346 = vmatpush1.bf16.xpose.msra.mxu0 0
        %1347 = vmatprep.subr.bf16.mxu0 0
        %1348 = vmatpush1.bf16.xpose.msra.mxu0 0
        %1349 = vmatprep.subr.bf16.mxu0 0
        %1350 = vmatpush1.bf16.xpose.msra.mxu0 0
        %1351 = vmatprep.subr.bf16.mxu0 0
        %1352 = vmatpush1.bf16.xpose.msra.mxu0 0
        %1353 = vmatprep.subr.bf16.mxu0 0
        %1354 = vmatpush1.bf16.xpose.msra.mxu0 0
        %1355 = vmatprep.subr.bf16.mxu0 0
        %1356 = vmatpush1.bf16.xpose.msra.mxu0 0
        %1357 = vmatprep.subr.bf16.mxu0 0
        %1358 = vmatpush1.bf16.xpose.msra.mxu0 0
        %1359 = vmatprep.subr.bf16.mxu0 0
        %1360 = vmatpush1.bf16.xpose.msra.mxu0 0
        %1361 = vmatprep.subr.bf16.mxu0 0
        %1362 = vmatpush1.bf16.xpose.msra.mxu0 0
        %1363 = vmatprep.subr.bf16.mxu0 0
        %1364 = vmatpush1.bf16.xpose.msra.mxu0 0
        %1365 = vmatprep.subr.bf16.mxu0 0
        %1366 = vmatpush1.bf16.xpose.msra.mxu0 0
        %1367 = vmatprep.subr.bf16.mxu0 0
        %1368 = vmatpush1.bf16.xpose.msra.mxu0 0
        %1369 = vmatprep.mubr.bf16.mxu0 0
        %1370 = vmatmul.mubr.bf16.gmra.mrb[0].mxu0 %v1332
        %v1371 = vpop.f32.mrb[0].mxu0
        %v1372 = vadd.f32 0.0, %v1371
        %v1373 = vpop.f32.mrb[0].mxu0
        %v1374 = vpop.f32.mrb[0].mxu0
        %v1375 = vpop.f32.mrb[0].mxu0
        %1376 = vdwg.mxu0
        %1378 = vrot.lane.b32.xlu0 %v1128, 96
        %v1379 = vpop.permute.xlu0 %1378
        %v1381 = vsel %vm1134, %v1100, 0
        %v1384 = vsel %vm1134, %v1379, 0
        %1386 = vmatprep.subr.bf16.mxu0 0
        %1387 = vmatpush1.bf16.xpose.msra.mxu0 %v1384
        %1388 = vmatprep.subr.bf16.mxu0 0
        %1389 = vmatpush1.bf16.xpose.msra.mxu0 0
        %1390 = vmatprep.subr.bf16.mxu0 0
        %1391 = vmatpush1.bf16.xpose.msra.mxu0 0
        %1392 = vmatprep.subr.bf16.mxu0 0
        %1393 = vmatpush1.bf16.xpose.msra.mxu0 0
        %1394 = vmatprep.subr.bf16.mxu0 0
        %1395 = vmatpush1.bf16.xpose.msra.mxu0 0
        %1396 = vmatprep.subr.bf16.mxu0 0
        %1397 = vmatpush1.bf16.xpose.msra.mxu0 0
        %1398 = vmatprep.subr.bf16.mxu0 0
        %1399 = vmatpush1.bf16.xpose.msra.mxu0 0
        %1400 = vmatprep.subr.bf16.mxu0 0
        %1401 = vmatpush1.bf16.xpose.msra.mxu0 0
        %1402 = vmatprep.subr.bf16.mxu0 0
        %1403 = vmatpush1.bf16.xpose.msra.mxu0 0
        %1404 = vmatprep.subr.bf16.mxu0 0
        %1405 = vmatpush1.bf16.xpose.msra.mxu0 0
        %1406 = vmatprep.subr.bf16.mxu0 0
        %1407 = vmatpush1.bf16.xpose.msra.mxu0 0
        %1408 = vmatprep.subr.bf16.mxu0 0
        %1409 = vmatpush1.bf16.xpose.msra.mxu0 0
        %1410 = vmatprep.subr.bf16.mxu0 0
        %1411 = vmatpush1.bf16.xpose.msra.mxu0 0
        %1412 = vmatprep.subr.bf16.mxu0 0
        %1413 = vmatpush1.bf16.xpose.msra.mxu0 0
        %1414 = vmatprep.subr.bf16.mxu0 0
        %1415 = vmatpush1.bf16.xpose.msra.mxu0 0
        %1416 = vmatprep.subr.bf16.mxu0 0
        %1417 = vmatpush1.bf16.xpose.msra.mxu0 0
        %1418 = vmatprep.mubr.bf16.mxu0 0
        %1419 = vmatmul.mubr.bf16.gmra.mrb[0].mxu0 %v1381
        %v1420 = vpop.f32.mrb[0].mxu0
        %v1421 = vadd.f32 0.0, %v1420
        %v1422 = vpop.f32.mrb[0].mxu0
        %v1423 = vpop.f32.mrb[0].mxu0
        %v1424 = vpop.f32.mrb[0].mxu0
        %1425 = vdwg.mxu0
        %1427 = vrot.lane.b32.xlu0 %v1129, 96
        %v1428 = vpop.permute.xlu0 %1427
        %v1430 = vsel %vm1134, %v1101, 0
        %v1433 = vsel %vm1134, %v1428, 0
        %1435 = vmatprep.subr.bf16.mxu0 0
        %1436 = vmatpush1.bf16.xpose.msra.mxu0 %v1433
        %1437 = vmatprep.subr.bf16.mxu0 0
        %1438 = vmatpush1.bf16.xpose.msra.mxu0 0
        %1439 = vmatprep.subr.bf16.mxu0 0
        %1440 = vmatpush1.bf16.xpose.msra.mxu0 0
        %1441 = vmatprep.subr.bf16.mxu0 0
        %1442 = vmatpush1.bf16.xpose.msra.mxu0 0
        %1443 = vmatprep.subr.bf16.mxu0 0
        %1444 = vmatpush1.bf16.xpose.msra.mxu0 0
        %1445 = vmatprep.subr.bf16.mxu0 0
        %1446 = vmatpush1.bf16.xpose.msra.mxu0 0
        %1447 = vmatprep.subr.bf16.mxu0 0
        %1448 = vmatpush1.bf16.xpose.msra.mxu0 0
        %1449 = vmatprep.subr.bf16.mxu0 0
        %1450 = vmatpush1.bf16.xpose.msra.mxu0 0
        %1451 = vmatprep.subr.bf16.mxu0 0
        %1452 = vmatpush1.bf16.xpose.msra.mxu0 0
        %1453 = vmatprep.subr.bf16.mxu0 0
        %1454 = vmatpush1.bf16.xpose.msra.mxu0 0
        %1455 = vmatprep.subr.bf16.mxu0 0
        %1456 = vmatpush1.bf16.xpose.msra.mxu0 0
        %1457 = vmatprep.subr.bf16.mxu0 0
        %1458 = vmatpush1.bf16.xpose.msra.mxu0 0
        %1459 = vmatprep.subr.bf16.mxu0 0
        %1460 = vmatpush1.bf16.xpose.msra.mxu0 0
        %1461 = vmatprep.subr.bf16.mxu0 0
        %1462 = vmatpush1.bf16.xpose.msra.mxu0 0
        %1463 = vmatprep.subr.bf16.mxu0 0
        %1464 = vmatpush1.bf16.xpose.msra.mxu0 0
        %1465 = vmatprep.subr.bf16.mxu0 0
        %1466 = vmatpush1.bf16.xpose.msra.mxu0 0
        %1467 = vmatprep.mubr.bf16.mxu0 0
        %1468 = vmatmul.mubr.bf16.gmra.mrb[0].mxu0 %v1430
        %v1469 = vpop.f32.mrb[0].mxu0
        %v1470 = vadd.f32 0.0, %v1469
        %v1471 = vpop.f32.mrb[0].mxu0
        %v1472 = vpop.f32.mrb[0].mxu0
        %v1473 = vpop.f32.mrb[0].mxu0
        %1474 = vdwg.mxu0
        %1476 = vrot.lane.b32.xlu0 %v1130, 96
        %v1477 = vpop.permute.xlu0 %1476
        %v1479 = vsel %vm1134, %v1102, 0
        %v1482 = vsel %vm1134, %v1477, 0
        %1484 = vmatprep.subr.bf16.mxu0 0
        %1485 = vmatpush1.bf16.xpose.msra.mxu0 %v1482
        %1486 = vmatprep.subr.bf16.mxu0 0
        %1487 = vmatpush1.bf16.xpose.msra.mxu0 0
        %1488 = vmatprep.subr.bf16.mxu0 0
        %1489 = vmatpush1.bf16.xpose.msra.mxu0 0
        %1490 = vmatprep.subr.bf16.mxu0 0
        %1491 = vmatpush1.bf16.xpose.msra.mxu0 0
        %1492 = vmatprep.subr.bf16.mxu0 0
        %1493 = vmatpush1.bf16.xpose.msra.mxu0 0
        %1494 = vmatprep.subr.bf16.mxu0 0
        %1495 = vmatpush1.bf16.xpose.msra.mxu0 0
        %1496 = vmatprep.subr.bf16.mxu0 0
        %1497 = vmatpush1.bf16.xpose.msra.mxu0 0
        %1498 = vmatprep.subr.bf16.mxu0 0
        %1499 = vmatpush1.bf16.xpose.msra.mxu0 0
        %1500 = vmatprep.subr.bf16.mxu0 0
        %1501 = vmatpush1.bf16.xpose.msra.mxu0 0
        %1502 = vmatprep.subr.bf16.mxu0 0
        %1503 = vmatpush1.bf16.xpose.msra.mxu0 0
        %1504 = vmatprep.subr.bf16.mxu0 0
        %1505 = vmatpush1.bf16.xpose.msra.mxu0 0
        %1506 = vmatprep.subr.bf16.mxu0 0
        %1507 = vmatpush1.bf16.xpose.msra.mxu0 0
        %1508 = vmatprep.subr.bf16.mxu0 0
        %1509 = vmatpush1.bf16.xpose.msra.mxu0 0
        %1510 = vmatprep.subr.bf16.mxu0 0
        %1511 = vmatpush1.bf16.xpose.msra.mxu0 0
        %1512 = vmatprep.subr.bf16.mxu0 0
        %1513 = vmatpush1.bf16.xpose.msra.mxu0 0
        %1514 = vmatprep.subr.bf16.mxu0 0
        %1515 = vmatpush1.bf16.xpose.msra.mxu0 0
        %1516 = vmatprep.mubr.bf16.mxu0 0
        %1517 = vmatmul.mubr.bf16.gmra.mrb[0].mxu0 %v1479
        %v1518 = vpop.f32.mrb[0].mxu0
        %v1519 = vadd.f32 0.0, %v1518
        %v1520 = vpop.f32.mrb[0].mxu0
        %v1521 = vpop.f32.mrb[0].mxu0
        %v1522 = vpop.f32.mrb[0].mxu0
        %1523 = vdwg.mxu0
        %v1524 = vsel %vm1134, %v1176, -inf
        %1525 = vmax.xlane.f32.xlu0 %v1524
        %v1526 = vpop.xlane.xlu0 %1525
        %v1527 = vsel %vm1134, %v1225, -inf
        %1528 = vmax.xlane.f32.xlu0 %v1527
        %v1529 = vpop.xlane.xlu0 %1528
        %v1530 = vsel %vm1134, %v1274, -inf
        %1531 = vmax.xlane.f32.xlu0 %v1530
        %v1532 = vpop.xlane.xlu0 %1531
        %v1533 = vsel %vm1134, %v1323, -inf
        %1534 = vmax.xlane.f32.xlu0 %v1533
        %v1535 = vpop.xlane.xlu0 %1534
        %v1536 = vsel %vm1134, %v1372, -inf
        %1537 = vmax.xlane.f32.xlu0 %v1536
        %v1538 = vpop.xlane.xlu0 %1537
        %v1539 = vsel %vm1134, %v1421, -inf
        %1540 = vmax.xlane.f32.xlu0 %v1539
        %v1541 = vpop.xlane.xlu0 %1540
        %v1542 = vsel %vm1134, %v1470, -inf
        %1543 = vmax.xlane.f32.xlu0 %v1542
        %v1544 = vpop.xlane.xlu0 %1543
        %v1545 = vsel %vm1134, %v1519, -inf
        %1546 = vmax.xlane.f32.xlu0 %v1545
        %v1547 = vpop.xlane.xlu0 %1546
        %v1548 = vsub.f32 %v1176, %v1526
        %v1549 = vsub.f32 %v1225, %v1529
        %v1550 = vsub.f32 %v1274, %v1532
        %v1551 = vsub.f32 %v1323, %v1535
        %v1552 = vsub.f32 %v1372, %v1538
        %v1553 = vsub.f32 %v1421, %v1541
        %v1554 = vsub.f32 %v1470, %v1544
        %v1555 = vsub.f32 %v1519, %v1547
        %v1556 = vmul.f32 %v1548, 1.442695
        %v1557 = vpow.pop %v1556
        %v1558 = vmul.f32 %v1549, 1.442695
        %v1559 = vpow.pop %v1558
        %v1560 = vmul.f32 %v1550, 1.442695
        %v1561 = vpow.pop %v1560
        %v1562 = vmul.f32 %v1551, 1.442695
        %v1563 = vpow.pop %v1562
        %v1564 = vmul.f32 %v1552, 1.442695
        %v1565 = vpow.pop %v1564
        %v1566 = vmul.f32 %v1553, 1.442695
        %v1567 = vpow.pop %v1566
        %v1568 = vmul.f32 %v1554, 1.442695
        %v1569 = vpow.pop %v1568
        %v1570 = vmul.f32 %v1555, 1.442695
        %v1571 = vpow.pop %v1570
        %v1572 = vsel %vm1134, %v1557, 0.0
        %1573 = vadd.xlane.f32.xlu0 %v1572
        %v1574 = vpop.xlane.xlu0 %1573
        %v1575 = vsel %vm1134, %v1559, 0.0
        %1576 = vadd.xlane.f32.xlu0 %v1575
        %v1577 = vpop.xlane.xlu0 %1576
        %v1578 = vsel %vm1134, %v1561, 0.0
        %1579 = vadd.xlane.f32.xlu0 %v1578
        %v1580 = vpop.xlane.xlu0 %1579
        %v1581 = vsel %vm1134, %v1563, 0.0
        %1582 = vadd.xlane.f32.xlu0 %v1581
        %v1583 = vpop.xlane.xlu0 %1582
        %v1584 = vsel %vm1134, %v1565, 0.0
        %1585 = vadd.xlane.f32.xlu0 %v1584
        %v1586 = vpop.xlane.xlu0 %1585
        %v1587 = vsel %vm1134, %v1567, 0.0
        %1588 = vadd.xlane.f32.xlu0 %v1587
        %v1589 = vpop.xlane.xlu0 %1588
        %v1590 = vsel %vm1134, %v1569, 0.0
        %1591 = vadd.xlane.f32.xlu0 %v1590
        %v1592 = vpop.xlane.xlu0 %1591
        %v1593 = vsel %vm1134, %v1571, 0.0
        %1594 = vadd.xlane.f32.xlu0 %v1593
        %v1595 = vpop.xlane.xlu0 %1594
        %v1596 = vrcp.pop %v1574
        %v1597 = vrcp.pop %v1577
        %v1598 = vrcp.pop %v1580
        %v1599 = vrcp.pop %v1583
        %v1600 = vrcp.pop %v1586
        %v1601 = vrcp.pop %v1589
        %v1602 = vrcp.pop %v1592
        %v1603 = vrcp.pop %v1595
        %v1604 = vmul.f32 %v1557, %v1596
        %v1605 = vmul.f32 %v1559, %v1597
        %v1606 = vmul.f32 %v1561, %v1598
        %v1607 = vmul.f32 %v1563, %v1599
        %v1608 = vmul.f32 %v1565, %v1600
        %v1609 = vmul.f32 %v1567, %v1601
        %v1610 = vmul.f32 %v1569, %v1602
        %v1611 = vmul.f32 %v1571, %v1603
        %v1612 = vpack.c.bf16 %v1604, %v1604
        %v1613 = vpack.c.bf16 %v1605, %v1605
        %v1614 = vpack.c.bf16 %v1606, %v1606
        %v1615 = vpack.c.bf16 %v1607, %v1607
        %v1616 = vpack.c.bf16 %v1608, %v1608
        %v1617 = vpack.c.bf16 %v1609, %v1609
        %v1618 = vpack.c.bf16 %v1610, %v1610
        %v1619 = vpack.c.bf16 %v1611, %v1611
        %1620 = vrot.lane.b32.xlu0 %v1123, 64
        %v1621 = vpop.permute.xlu0 %1620
        %v1623 = vsel %vm1134, %v1612, 0
        %vm1625 = vcmask 1043456
        %v1627 = vsel %vm1625, %v1621, 0
        %1629 = vmatprep.subr.bf16.mxu0 0
        %1630 = vmatpush1.bf16.msra.mxu0 %v1627
        %1631 = vmatprep.subr.bf16.mxu0 0
        %1632 = vmatpush1.bf16.msra.mxu0 0
        %1633 = vmatprep.subr.bf16.mxu0 0
        %1634 = vmatpush1.bf16.msra.mxu0 0
        %1635 = vmatprep.subr.bf16.mxu0 0
        %1636 = vmatpush1.bf16.msra.mxu0 0
        %1637 = vmatprep.subr.bf16.mxu0 0
        %1638 = vmatpush1.bf16.msra.mxu0 0
        %1639 = vmatprep.subr.bf16.mxu0 0
        %1640 = vmatpush1.bf16.msra.mxu0 0
        %1641 = vmatprep.subr.bf16.mxu0 0
        %1642 = vmatpush1.bf16.msra.mxu0 0
        %1643 = vmatprep.subr.bf16.mxu0 0
        %1644 = vmatpush1.bf16.msra.mxu0 0
        %1645 = vmatprep.subr.bf16.mxu0 0
        %1646 = vmatpush1.bf16.msra.mxu0 0
        %1647 = vmatprep.subr.bf16.mxu0 0
        %1648 = vmatpush1.bf16.msra.mxu0 0
        %1649 = vmatprep.subr.bf16.mxu0 0
        %1650 = vmatpush1.bf16.msra.mxu0 0
        %1651 = vmatprep.subr.bf16.mxu0 0
        %1652 = vmatpush1.bf16.msra.mxu0 0
        %1653 = vmatprep.subr.bf16.mxu0 0
        %1654 = vmatpush1.bf16.msra.mxu0 0
        %1655 = vmatprep.subr.bf16.mxu0 0
        %1656 = vmatpush1.bf16.msra.mxu0 0
        %1657 = vmatprep.subr.bf16.mxu0 0
        %1658 = vmatpush1.bf16.msra.mxu0 0
        %1659 = vmatprep.subr.bf16.mxu0 0
        %1660 = vmatpush1.bf16.msra.mxu0 0
        %1661 = vmatprep.mubr.bf16.mxu0 0
        %1662 = vmatmul.mubr.bf16.gmra.mrb[0].mxu0 %v1623
        %v1663 = vpop.f32.mrb[0].mxu0
        %v1664 = vadd.f32 0.0, %v1663
        %v1665 = vpop.f32.mrb[0].mxu0
        %v1666 = vpop.f32.mrb[0].mxu0
        %v1667 = vpop.f32.mrb[0].mxu0
        %1668 = vdwg.mxu0
        %1669 = vrot.lane.b32.xlu0 %v1124, 64
        %v1670 = vpop.permute.xlu0 %1669
        %v1672 = vsel %vm1134, %v1613, 0
        %v1675 = vsel %vm1625, %v1670, 0
        %1677 = vmatprep.subr.bf16.mxu0 0
        %1678 = vmatpush1.bf16.msra.mxu0 %v1675
        %1679 = vmatprep.subr.bf16.mxu0 0
        %1680 = vmatpush1.bf16.msra.mxu0 0
        %1681 = vmatprep.subr.bf16.mxu0 0
        %1682 = vmatpush1.bf16.msra.mxu0 0
        %1683 = vmatprep.subr.bf16.mxu0 0
        %1684 = vmatpush1.bf16.msra.mxu0 0
        %1685 = vmatprep.subr.bf16.mxu0 0
        %1686 = vmatpush1.bf16.msra.mxu0 0
        %1687 = vmatprep.subr.bf16.mxu0 0
        %1688 = vmatpush1.bf16.msra.mxu0 0
        %1689 = vmatprep.subr.bf16.mxu0 0
        %1690 = vmatpush1.bf16.msra.mxu0 0
        %1691 = vmatprep.subr.bf16.mxu0 0
        %1692 = vmatpush1.bf16.msra.mxu0 0
        %1693 = vmatprep.subr.bf16.mxu0 0
        %1694 = vmatpush1.bf16.msra.mxu0 0
        %1695 = vmatprep.subr.bf16.mxu0 0
        %1696 = vmatpush1.bf16.msra.mxu0 0
        %1697 = vmatprep.subr.bf16.mxu0 0
        %1698 = vmatpush1.bf16.msra.mxu0 0
        %1699 = vmatprep.subr.bf16.mxu0 0
        %1700 = vmatpush1.bf16.msra.mxu0 0
        %1701 = vmatprep.subr.bf16.mxu0 0
        %1702 = vmatpush1.bf16.msra.mxu0 0
        %1703 = vmatprep.subr.bf16.mxu0 0
        %1704 = vmatpush1.bf16.msra.mxu0 0
        %1705 = vmatprep.subr.bf16.mxu0 0
        %1706 = vmatpush1.bf16.msra.mxu0 0
        %1707 = vmatprep.subr.bf16.mxu0 0
        %1708 = vmatpush1.bf16.msra.mxu0 0
        %1709 = vmatprep.mubr.bf16.mxu0 0
        %1710 = vmatmul.mubr.bf16.gmra.mrb[0].mxu0 %v1672
        %v1711 = vpop.f32.mrb[0].mxu0
        %v1712 = vadd.f32 0.0, %v1711
        %v1713 = vpop.f32.mrb[0].mxu0
        %v1714 = vpop.f32.mrb[0].mxu0
        %v1715 = vpop.f32.mrb[0].mxu0
        %1716 = vdwg.mxu0
        %1717 = vrot.lane.b32.xlu0 %v1125, 64
        %v1718 = vpop.permute.xlu0 %1717
        %v1720 = vsel %vm1134, %v1614, 0
        %v1723 = vsel %vm1625, %v1718, 0
        %1725 = vmatprep.subr.bf16.mxu0 0
        %1726 = vmatpush1.bf16.msra.mxu0 %v1723
        %1727 = vmatprep.subr.bf16.mxu0 0
        %1728 = vmatpush1.bf16.msra.mxu0 0
        %1729 = vmatprep.subr.bf16.mxu0 0
        %1730 = vmatpush1.bf16.msra.mxu0 0
        %1731 = vmatprep.subr.bf16.mxu0 0
        %1732 = vmatpush1.bf16.msra.mxu0 0
        %1733 = vmatprep.subr.bf16.mxu0 0
        %1734 = vmatpush1.bf16.msra.mxu0 0
        %1735 = vmatprep.subr.bf16.mxu0 0
        %1736 = vmatpush1.bf16.msra.mxu0 0
        %1737 = vmatprep.subr.bf16.mxu0 0
        %1738 = vmatpush1.bf16.msra.mxu0 0
        %1739 = vmatprep.subr.bf16.mxu0 0
        %1740 = vmatpush1.bf16.msra.mxu0 0
        %1741 = vmatprep.subr.bf16.mxu0 0
        %1742 = vmatpush1.bf16.msra.mxu0 0
        %1743 = vmatprep.subr.bf16.mxu0 0
        %1744 = vmatpush1.bf16.msra.mxu0 0
        %1745 = vmatprep.subr.bf16.mxu0 0
        %1746 = vmatpush1.bf16.msra.mxu0 0
        %1747 = vmatprep.subr.bf16.mxu0 0
        %1748 = vmatpush1.bf16.msra.mxu0 0
        %1749 = vmatprep.subr.bf16.mxu0 0
        %1750 = vmatpush1.bf16.msra.mxu0 0
        %1751 = vmatprep.subr.bf16.mxu0 0
        %1752 = vmatpush1.bf16.msra.mxu0 0
        %1753 = vmatprep.subr.bf16.mxu0 0
        %1754 = vmatpush1.bf16.msra.mxu0 0
        %1755 = vmatprep.subr.bf16.mxu0 0
        %1756 = vmatpush1.bf16.msra.mxu0 0
        %1757 = vmatprep.mubr.bf16.mxu0 0
        %1758 = vmatmul.mubr.bf16.gmra.mrb[0].mxu0 %v1720
        %v1759 = vpop.f32.mrb[0].mxu0
        %v1760 = vadd.f32 0.0, %v1759
        %v1761 = vpop.f32.mrb[0].mxu0
        %v1762 = vpop.f32.mrb[0].mxu0
        %v1763 = vpop.f32.mrb[0].mxu0
        %1764 = vdwg.mxu0
        %1765 = vrot.lane.b32.xlu0 %v1126, 64
        %v1766 = vpop.permute.xlu0 %1765
        %v1768 = vsel %vm1134, %v1615, 0
        %v1771 = vsel %vm1625, %v1766, 0
        %1773 = vmatprep.subr.bf16.mxu0 0
        %1774 = vmatpush1.bf16.msra.mxu0 %v1771
        %1775 = vmatprep.subr.bf16.mxu0 0
        %1776 = vmatpush1.bf16.msra.mxu0 0
        %1777 = vmatprep.subr.bf16.mxu0 0
        %1778 = vmatpush1.bf16.msra.mxu0 0
        %1779 = vmatprep.subr.bf16.mxu0 0
        %1780 = vmatpush1.bf16.msra.mxu0 0
        %1781 = vmatprep.subr.bf16.mxu0 0
        %1782 = vmatpush1.bf16.msra.mxu0 0
        %1783 = vmatprep.subr.bf16.mxu0 0
        %1784 = vmatpush1.bf16.msra.mxu0 0
        %1785 = vmatprep.subr.bf16.mxu0 0
        %1786 = vmatpush1.bf16.msra.mxu0 0
        %1787 = vmatprep.subr.bf16.mxu0 0
        %1788 = vmatpush1.bf16.msra.mxu0 0
        %1789 = vmatprep.subr.bf16.mxu0 0
        %1790 = vmatpush1.bf16.msra.mxu0 0
        %1791 = vmatprep.subr.bf16.mxu0 0
        %1792 = vmatpush1.bf16.msra.mxu0 0
        %1793 = vmatprep.subr.bf16.mxu0 0
        %1794 = vmatpush1.bf16.msra.mxu0 0
        %1795 = vmatprep.subr.bf16.mxu0 0
        %1796 = vmatpush1.bf16.msra.mxu0 0
        %1797 = vmatprep.subr.bf16.mxu0 0
        %1798 = vmatpush1.bf16.msra.mxu0 0
        %1799 = vmatprep.subr.bf16.mxu0 0
        %1800 = vmatpush1.bf16.msra.mxu0 0
        %1801 = vmatprep.subr.bf16.mxu0 0
        %1802 = vmatpush1.bf16.msra.mxu0 0
        %1803 = vmatprep.subr.bf16.mxu0 0
        %1804 = vmatpush1.bf16.msra.mxu0 0
        %1805 = vmatprep.mubr.bf16.mxu0 0
        %1806 = vmatmul.mubr.bf16.gmra.mrb[0].mxu0 %v1768
        %v1807 = vpop.f32.mrb[0].mxu0
        %v1808 = vadd.f32 0.0, %v1807
        %v1809 = vpop.f32.mrb[0].mxu0
        %v1810 = vpop.f32.mrb[0].mxu0
        %v1811 = vpop.f32.mrb[0].mxu0
        %1812 = vdwg.mxu0
        %1813 = vrot.lane.b32.xlu0 %v1127, 64
        %v1814 = vpop.permute.xlu0 %1813
        %v1816 = vsel %vm1134, %v1616, 0
        %v1819 = vsel %vm1625, %v1814, 0
        %1821 = vmatprep.subr.bf16.mxu0 0
        %1822 = vmatpush1.bf16.msra.mxu0 %v1819
        %1823 = vmatprep.subr.bf16.mxu0 0
        %1824 = vmatpush1.bf16.msra.mxu0 0
        %1825 = vmatprep.subr.bf16.mxu0 0
        %1826 = vmatpush1.bf16.msra.mxu0 0
        %1827 = vmatprep.subr.bf16.mxu0 0
        %1828 = vmatpush1.bf16.msra.mxu0 0
        %1829 = vmatprep.subr.bf16.mxu0 0
        %1830 = vmatpush1.bf16.msra.mxu0 0
        %1831 = vmatprep.subr.bf16.mxu0 0
        %1832 = vmatpush1.bf16.msra.mxu0 0
        %1833 = vmatprep.subr.bf16.mxu0 0
        %1834 = vmatpush1.bf16.msra.mxu0 0
        %1835 = vmatprep.subr.bf16.mxu0 0
        %1836 = vmatpush1.bf16.msra.mxu0 0
        %1837 = vmatprep.subr.bf16.mxu0 0
        %1838 = vmatpush1.bf16.msra.mxu0 0
        %1839 = vmatprep.subr.bf16.mxu0 0
        %1840 = vmatpush1.bf16.msra.mxu0 0
        %1841 = vmatprep.subr.bf16.mxu0 0
        %1842 = vmatpush1.bf16.msra.mxu0 0
        %1843 = vmatprep.subr.bf16.mxu0 0
        %1844 = vmatpush1.bf16.msra.mxu0 0
        %1845 = vmatprep.subr.bf16.mxu0 0
        %1846 = vmatpush1.bf16.msra.mxu0 0
        %1847 = vmatprep.subr.bf16.mxu0 0
        %1848 = vmatpush1.bf16.msra.mxu0 0
        %1849 = vmatprep.subr.bf16.mxu0 0
        %1850 = vmatpush1.bf16.msra.mxu0 0
        %1851 = vmatprep.subr.bf16.mxu0 0
        %1852 = vmatpush1.bf16.msra.mxu0 0
        %1853 = vmatprep.mubr.bf16.mxu0 0
        %1854 = vmatmul.mubr.bf16.gmra.mrb[0].mxu0 %v1816
        %v1855 = vpop.f32.mrb[0].mxu0
        %v1856 = vadd.f32 0.0, %v1855
        %v1857 = vpop.f32.mrb[0].mxu0
        %v1858 = vpop.f32.mrb[0].mxu0
        %v1859 = vpop.f32.mrb[0].mxu0
        %1860 = vdwg.mxu0
        %1861 = vrot.lane.b32.xlu0 %v1128, 64
        %v1862 = vpop.permute.xlu0 %1861
        %v1864 = vsel %vm1134, %v1617, 0
        %v1867 = vsel %vm1625, %v1862, 0
        %1869 = vmatprep.subr.bf16.mxu0 0
        %1870 = vmatpush1.bf16.msra.mxu0 %v1867
        %1871 = vmatprep.subr.bf16.mxu0 0
        %1872 = vmatpush1.bf16.msra.mxu0 0
        %1873 = vmatprep.subr.bf16.mxu0 0
        %1874 = vmatpush1.bf16.msra.mxu0 0
        %1875 = vmatprep.subr.bf16.mxu0 0
        %1876 = vmatpush1.bf16.msra.mxu0 0
        %1877 = vmatprep.subr.bf16.mxu0 0
        %1878 = vmatpush1.bf16.msra.mxu0 0
        %1879 = vmatprep.subr.bf16.mxu0 0
        %1880 = vmatpush1.bf16.msra.mxu0 0
        %1881 = vmatprep.subr.bf16.mxu0 0
        %1882 = vmatpush1.bf16.msra.mxu0 0
        %1883 = vmatprep.subr.bf16.mxu0 0
        %1884 = vmatpush1.bf16.msra.mxu0 0
        %1885 = vmatprep.subr.bf16.mxu0 0
        %1886 = vmatpush1.bf16.msra.mxu0 0
        %1887 = vmatprep.subr.bf16.mxu0 0
        %1888 = vmatpush1.bf16.msra.mxu0 0
        %1889 = vmatprep.subr.bf16.mxu0 0
        %1890 = vmatpush1.bf16.msra.mxu0 0
        %1891 = vmatprep.subr.bf16.mxu0 0
        %1892 = vmatpush1.bf16.msra.mxu0 0
        %1893 = vmatprep.subr.bf16.mxu0 0
        %1894 = vmatpush1.bf16.msra.mxu0 0
        %1895 = vmatprep.subr.bf16.mxu0 0
        %1896 = vmatpush1.bf16.msra.mxu0 0
        %1897 = vmatprep.subr.bf16.mxu0 0
        %1898 = vmatpush1.bf16.msra.mxu0 0
        %1899 = vmatprep.subr.bf16.mxu0 0
        %1900 = vmatpush1.bf16.msra.mxu0 0
        %1901 = vmatprep.mubr.bf16.mxu0 0
        %1902 = vmatmul.mubr.bf16.gmra.mrb[0].mxu0 %v1864
        %v1903 = vpop.f32.mrb[0].mxu0
        %v1904 = vadd.f32 0.0, %v1903
        %v1905 = vpop.f32.mrb[0].mxu0
        %v1906 = vpop.f32.mrb[0].mxu0
        %v1907 = vpop.f32.mrb[0].mxu0
        %1908 = vdwg.mxu0
        %1909 = vrot.lane.b32.xlu0 %v1129, 64
        %v1910 = vpop.permute.xlu0 %1909
        %v1912 = vsel %vm1134, %v1618, 0
        %v1915 = vsel %vm1625, %v1910, 0
        %1917 = vmatprep.subr.bf16.mxu0 0
        %1918 = vmatpush1.bf16.msra.mxu0 %v1915
        %1919 = vmatprep.subr.bf16.mxu0 0
        %1920 = vmatpush1.bf16.msra.mxu0 0
        %1921 = vmatprep.subr.bf16.mxu0 0
        %1922 = vmatpush1.bf16.msra.mxu0 0
        %1923 = vmatprep.subr.bf16.mxu0 0
        %1924 = vmatpush1.bf16.msra.mxu0 0
        %1925 = vmatprep.subr.bf16.mxu0 0
        %1926 = vmatpush1.bf16.msra.mxu0 0
        %1927 = vmatprep.subr.bf16.mxu0 0
        %1928 = vmatpush1.bf16.msra.mxu0 0
        %1929 = vmatprep.subr.bf16.mxu0 0
        %1930 = vmatpush1.bf16.msra.mxu0 0
        %1931 = vmatprep.subr.bf16.mxu0 0
        %1932 = vmatpush1.bf16.msra.mxu0 0
        %1933 = vmatprep.subr.bf16.mxu0 0
        %1934 = vmatpush1.bf16.msra.mxu0 0
        %1935 = vmatprep.subr.bf16.mxu0 0
        %1936 = vmatpush1.bf16.msra.mxu0 0
        %1937 = vmatprep.subr.bf16.mxu0 0
        %1938 = vmatpush1.bf16.msra.mxu0 0
        %1939 = vmatprep.subr.bf16.mxu0 0
        %1940 = vmatpush1.bf16.msra.mxu0 0
        %1941 = vmatprep.subr.bf16.mxu0 0
        %1942 = vmatpush1.bf16.msra.mxu0 0
        %1943 = vmatprep.subr.bf16.mxu0 0
        %1944 = vmatpush1.bf16.msra.mxu0 0
        %1945 = vmatprep.subr.bf16.mxu0 0
        %1946 = vmatpush1.bf16.msra.mxu0 0
        %1947 = vmatprep.subr.bf16.mxu0 0
        %1948 = vmatpush1.bf16.msra.mxu0 0
        %1949 = vmatprep.mubr.bf16.mxu0 0
        %1950 = vmatmul.mubr.bf16.gmra.mrb[0].mxu0 %v1912
        %v1951 = vpop.f32.mrb[0].mxu0
        %v1952 = vadd.f32 0.0, %v1951
        %v1953 = vpop.f32.mrb[0].mxu0
        %v1954 = vpop.f32.mrb[0].mxu0
        %v1955 = vpop.f32.mrb[0].mxu0
        %1956 = vdwg.mxu0
        %1957 = vrot.lane.b32.xlu0 %v1130, 64
        %v1958 = vpop.permute.xlu0 %1957
        %v1960 = vsel %vm1134, %v1619, 0
        %v1963 = vsel %vm1625, %v1958, 0
        %1965 = vmatprep.subr.bf16.mxu0 0
        %1966 = vmatpush1.bf16.msra.mxu0 %v1963
        %1967 = vmatprep.subr.bf16.mxu0 0
        %1968 = vmatpush1.bf16.msra.mxu0 0
        %1969 = vmatprep.subr.bf16.mxu0 0
        %1970 = vmatpush1.bf16.msra.mxu0 0
        %1971 = vmatprep.subr.bf16.mxu0 0
        %1972 = vmatpush1.bf16.msra.mxu0 0
        %1973 = vmatprep.subr.bf16.mxu0 0
        %1974 = vmatpush1.bf16.msra.mxu0 0
        %1975 = vmatprep.subr.bf16.mxu0 0
        %1976 = vmatpush1.bf16.msra.mxu0 0
        %1977 = vmatprep.subr.bf16.mxu0 0
        %1978 = vmatpush1.bf16.msra.mxu0 0
        %1979 = vmatprep.subr.bf16.mxu0 0
        %1980 = vmatpush1.bf16.msra.mxu0 0
        %1981 = vmatprep.subr.bf16.mxu0 0
        %1982 = vmatpush1.bf16.msra.mxu0 0
        %1983 = vmatprep.subr.bf16.mxu0 0
        %1984 = vmatpush1.bf16.msra.mxu0 0
        %1985 = vmatprep.subr.bf16.mxu0 0
        %1986 = vmatpush1.bf16.msra.mxu0 0
        %1987 = vmatprep.subr.bf16.mxu0 0
        %1988 = vmatpush1.bf16.msra.mxu0 0
        %1989 = vmatprep.subr.bf16.mxu0 0
        %1990 = vmatpush1.bf16.msra.mxu0 0
        %1991 = vmatprep.subr.bf16.mxu0 0
        %1992 = vmatpush1.bf16.msra.mxu0 0
        %1993 = vmatprep.subr.bf16.mxu0 0
        %1994 = vmatpush1.bf16.msra.mxu0 0
        %1995 = vmatprep.subr.bf16.mxu0 0
        %1996 = vmatpush1.bf16.msra.mxu0 0
        %1997 = vmatprep.mubr.bf16.mxu0 0
        %1998 = vmatmul.mubr.bf16.gmra.mrb[0].mxu0 %v1960
        %v1999 = vpop.f32.mrb[0].mxu0
        %v2000 = vadd.f32 0.0, %v1999
        %v2001 = vpop.f32.mrb[0].mxu0
        %v2002 = vpop.f32.mrb[0].mxu0
        %v2003 = vpop.f32.mrb[0].mxu0
        %2004 = vdwg.mxu0
        %2007 = vrot.lane.b32.xlu0 %v1760, 8
        %v2008 = vpop.permute.xlu0 %2007
        %2009 = vrot.lane.b32.xlu0 %v1808, 8
        %v2010 = vpop.permute.xlu0 %2009
        %2015 = vrot.lane.b32.xlu0 %v1856, 16
        %v2016 = vpop.permute.xlu0 %2015
        %2017 = vrot.lane.b32.xlu0 %v1904, 16
        %v2018 = vpop.permute.xlu0 %2017
        %2023 = vrot.lane.b32.xlu0 %v1952, 24
        %v2024 = vpop.permute.xlu0 %2023
        %2025 = vrot.lane.b32.xlu0 %v2000, 24
        %v2026 = vpop.permute.xlu0 %2025
        %v2029 = vsel %vm1134, %v1664, %v2008
        %v2030 = vsel %vm1134, %v1712, %v2010
        %vm2031 = vcmask 130048
        %v2032 = vsel %vm2031, %v2029, %v2016
        %v2033 = vsel %vm2031, %v2030, %v2018
        %vm2034 = vcmask 195584
        %v2035 = vsel %vm2034, %v2032, %v2024
        %v2036 = vsel %vm2034, %v2033, %v2026
        %v2037 = vpack.c.bf16 %v2036, %v2035
        %v2038 = vld [vmem:[%s807] sm:$0xf]
        %v2039 = vld [vmem:[%s807 + $0x4] sm:$0xf]
        %v2040 = vld [vmem:[%s807 + $0x8] sm:$0xf]
        %v2041 = vld [vmem:[%s807 + $0xc] sm:$0xf]
        %v2042 = vld [vmem:[%s810] sm:$0x1]
        %v2044 = vlaneseq
        %v2045 = vshrl.u32 %v2044, 7
        %v2046 = vsub.s32 0, %v2045
        %v2047 = vrot.slane %v2042, %v2046
        %v2053 = vunpack.c.l.b16 %v2038
        %v2054 = vunpack.c.l.b16 %v2039
        %v2055 = vunpack.c.l.b16 %v2040
        %v2056 = vunpack.c.l.b16 %v2041
        %v2057 = vpack.c.b16 %v2054, %v2053
        %v2058 = vpack.c.b16 %v2056, %v2055
        %v2062 = vsel %vm1028, %v2037, 0
        %2064 = vmatprep.subr.bf16.mxu0 0
        %2065 = vmatpush1.bf16.msra.mxu0 %v2057
        %2066 = vmatprep.subr.bf16.mxu0 0
        %2067 = vmatpush1.bf16.msra.mxu0 %v2058
        %2068 = vmatprep.subr.bf16.mxu0 0
        %2069 = vmatpush1.bf16.msra.mxu0 0
        %2070 = vmatprep.subr.bf16.mxu0 0
        %2071 = vmatpush1.bf16.msra.mxu0 0
        %2072 = vmatprep.subr.bf16.mxu0 0
        %2073 = vmatpush1.bf16.msra.mxu0 0
        %2074 = vmatprep.subr.bf16.mxu0 0
        %2075 = vmatpush1.bf16.msra.mxu0 0
        %2076 = vmatprep.subr.bf16.mxu0 0
        %2077 = vmatpush1.bf16.msra.mxu0 0
        %2078 = vmatprep.subr.bf16.mxu0 0
        %2079 = vmatpush1.bf16.msra.mxu0 0
        %2080 = vmatprep.subr.bf16.mxu0 0
        %2081 = vmatpush1.bf16.msra.mxu0 0
        %2082 = vmatprep.subr.bf16.mxu0 0
        %2083 = vmatpush1.bf16.msra.mxu0 0
        %2084 = vmatprep.subr.bf16.mxu0 0
        %2085 = vmatpush1.bf16.msra.mxu0 0
        %2086 = vmatprep.subr.bf16.mxu0 0
        %2087 = vmatpush1.bf16.msra.mxu0 0
        %2088 = vmatprep.subr.bf16.mxu0 0
        %2089 = vmatpush1.bf16.msra.mxu0 0
        %2090 = vmatprep.subr.bf16.mxu0 0
        %2091 = vmatpush1.bf16.msra.mxu0 0
        %2092 = vmatprep.subr.bf16.mxu0 0
        %2093 = vmatpush1.bf16.msra.mxu0 0
        %2094 = vmatprep.subr.bf16.mxu0 0
        %2095 = vmatpush1.bf16.msra.mxu0 0
        %2096 = vmatprep.mubr.bf16.mxu0 0
        %2097 = vmatmul.mubr.bf16.gmra.mrb[0].mxu0 %v2062
        %v2098 = vpop.f32.mrb[0].mxu0
        %v2099 = vadd.f32 %v2047, %v2098
        %v2100 = vpop.f32.mrb[0].mxu0
        %v2101 = vpop.f32.mrb[0].mxu0
        %v2102 = vadd.f32 %v2047, %v2101
        %v2103 = vpop.f32.mrb[0].mxu0
        %2104 = vdwg.mxu0
        %v2105 = vadd.f32 %v1002, %v2099
        %v2106 = vadd.f32 %v1003, %v2102
        %v2107 = vsel %vm1028, %v2105, 0.0
        %2108 = vadd.xlane.f32.xlu0 %v2107
        %v2109 = vpop.xlane.xlu0 %2108
        %v2110 = vsel %vm1028, %v2106, 0.0
        %2111 = vadd.xlane.f32.xlu0 %v2110
        %v2112 = vpop.xlane.xlu0 %2111
        %v2113 = vrcp.pop 32.0
        %v2114 = vmul.f32 %v2109, %v2113
        %v2115 = vmul.f32 %v2112, %v2113
        %v2116 = vsub.f32 %v2105, %v2114
        %v2117 = vsub.f32 %v2106, %v2115
        %v2118 = vmul.f32 %v2116, %v2116
        %v2119 = vmul.f32 %v2117, %v2117
        %v2120 = vsel %vm1028, %v2118, 0.0
        %2121 = vadd.xlane.f32.xlu0 %v2120
        %v2122 = vpop.xlane.xlu0 %2121
        %v2123 = vsel %vm1028, %v2119, 0.0
        %2124 = vadd.xlane.f32.xlu0 %v2123
        %v2125 = vpop.xlane.xlu0 %2124
        %v2126 = vmul.f32 %v2122, %v2113
        %v2127 = vmul.f32 %v2125, %v2113
        %v2128 = vadd.f32 %v2126, 1e-05
        %v2129 = vadd.f32 %v2127, 1e-05
        %v2130 = vrsqrt.pop %v2128
        %v2131 = vrsqrt.pop %v2129
        %v2132 = vmul.f32 %v2116, %v2130
        %v2133 = vmul.f32 %v2117, %v2131
        %v2134 = vld [vmem:[%s813] sm:$0x1]
        %v2136 = vlaneseq
        %v2137 = vshrl.u32 %v2136, 7
        %v2138 = vsub.s32 0, %v2137
        %v2139 = vrot.slane %v2134, %v2138
        %v2141 = vmul.f32 %v2132, %v2139
        %v2142 = vmul.f32 %v2133, %v2139
        %v2143 = vld [vmem:[%s816] sm:$0x1]
        %v2145 = vlaneseq
        %v2146 = vshrl.u32 %v2145, 7
        %v2147 = vsub.s32 0, %v2146
        %v2148 = vrot.slane %v2143, %v2147
        %v2150 = vadd.f32 %v2141, %v2148
        %v2151 = vadd.f32 %v2142, %v2148
        %v2152 = vpack.c.bf16 %v2151, %v2150
        %v2153 = vld [vmem:[%s821] sm:$0xf]
        %v2154 = vld [vmem:[%s821 + $0x4] sm:$0xf]
        %v2155 = vld [vmem:[%s821 + $0x8] sm:$0xf]
        %v2156 = vld [vmem:[%s821 + $0xc] sm:$0xf]
        %v2157 = vld [vmem:[%s824] sm:$0x1]
        %v2159 = vlaneseq
        %v2160 = vshrl.u32 %v2159, 7
        %v2161 = vsub.s32 0, %v2160
        %v2162 = vrot.slane %v2157, %v2161
        %v2168 = vunpack.c.l.b16 %v2153
        %v2169 = vunpack.c.l.b16 %v2154
        %v2170 = vunpack.c.l.b16 %v2155
        %v2171 = vunpack.c.l.b16 %v2156
        %v2172 = vpack.c.b16 %v2169, %v2168
        %v2173 = vpack.c.b16 %v2171, %v2170
        %v2177 = vsel %vm1028, %v2152, 0
        %2179 = vmatprep.subr.bf16.mxu0 0
        %2180 = vmatpush1.bf16.msra.mxu0 %v2172
        %2181 = vmatprep.subr.bf16.mxu0 0
        %2182 = vmatpush1.bf16.msra.mxu0 %v2173
        %2183 = vmatprep.subr.bf16.mxu0 0
        %2184 = vmatpush1.bf16.msra.mxu0 0
        %2185 = vmatprep.subr.bf16.mxu0 0
        %2186 = vmatpush1.bf16.msra.mxu0 0
        %2187 = vmatprep.subr.bf16.mxu0 0
        %2188 = vmatpush1.bf16.msra.mxu0 0
        %2189 = vmatprep.subr.bf16.mxu0 0
        %2190 = vmatpush1.bf16.msra.mxu0 0
        %2191 = vmatprep.subr.bf16.mxu0 0
        %2192 = vmatpush1.bf16.msra.mxu0 0
        %2193 = vmatprep.subr.bf16.mxu0 0
        %2194 = vmatpush1.bf16.msra.mxu0 0
        %2195 = vmatprep.subr.bf16.mxu0 0
        %2196 = vmatpush1.bf16.msra.mxu0 0
        %2197 = vmatprep.subr.bf16.mxu0 0
        %2198 = vmatpush1.bf16.msra.mxu0 0
        %2199 = vmatprep.subr.bf16.mxu0 0
        %2200 = vmatpush1.bf16.msra.mxu0 0
        %2201 = vmatprep.subr.bf16.mxu0 0
        %2202 = vmatpush1.bf16.msra.mxu0 0
        %2203 = vmatprep.subr.bf16.mxu0 0
        %2204 = vmatpush1.bf16.msra.mxu0 0
        %2205 = vmatprep.subr.bf16.mxu0 0
        %2206 = vmatpush1.bf16.msra.mxu0 0
        %2207 = vmatprep.subr.bf16.mxu0 0
        %2208 = vmatpush1.bf16.msra.mxu0 0
        %2209 = vmatprep.subr.bf16.mxu0 0
        %2210 = vmatpush1.bf16.msra.mxu0 0
        %2211 = vmatprep.mubr.bf16.mxu0 0
        %2212 = vmatmul.mubr.bf16.gmra.mrb[0].mxu0 %v2177
        %v2213 = vpop.f32.mrb[0].mxu0
        %v2214 = vadd.f32 %v2162, %v2213
        %v2215 = vpop.f32.mrb[0].mxu0
        %v2216 = vpop.f32.mrb[0].mxu0
        %v2217 = vadd.f32 %v2162, %v2216
        %v2218 = vpop.f32.mrb[0].mxu0
        %2219 = vdwg.mxu0
        %v2220 = vmax.f32 %v2214, 0.0
        %v2221 = vmax.f32 %v2217, 0.0
        %v2222 = vpack.c.bf16 %v2221, %v2220
        %v2223 = vld [vmem:[%s829] sm:$0xf]
        %v2224 = vld [vmem:[%s829 + $0x4] sm:$0xf]
        %v2225 = vld [vmem:[%s829 + $0x8] sm:$0xf]
        %v2226 = vld [vmem:[%s829 + $0xc] sm:$0xf]
        %v2227 = vld [vmem:[%s829 + $0x10] sm:$0xf]
        %v2228 = vld [vmem:[%s829 + $0x14] sm:$0xf]
        %v2229 = vld [vmem:[%s829 + $0x18] sm:$0xf]
        %v2230 = vld [vmem:[%s829 + $0x1c] sm:$0xf]
        %v2231 = vld [vmem:[%s832] sm:$0x1]
        %v2233 = vlaneseq
        %v2234 = vshrl.u32 %v2233, 7
        %v2235 = vsub.s32 0, %v2234
        %v2236 = vrot.slane %v2231, %v2235
        %v2246 = vunpack.c.l.b16 %v2223
        %v2247 = vunpack.c.l.b16 %v2224
        %v2248 = vunpack.c.l.b16 %v2225
        %v2249 = vunpack.c.l.b16 %v2226
        %v2250 = vunpack.c.l.b16 %v2227
        %v2251 = vunpack.c.l.b16 %v2228
        %v2252 = vunpack.c.l.b16 %v2229
        %v2253 = vunpack.c.l.b16 %v2230
        %v2254 = vpack.c.b16 %v2247, %v2246
        %v2255 = vpack.c.b16 %v2249, %v2248
        %v2256 = vpack.c.b16 %v2251, %v2250
        %v2257 = vpack.c.b16 %v2253, %v2252
        %vm2262 = vcmask 523264
        %v2264 = vsel %vm2262, %v2222, 0
        %2266 = vmatprep.subr.bf16.mxu0 0
        %2267 = vmatpush1.bf16.msra.mxu0 %v2254
        %2268 = vmatprep.subr.bf16.mxu0 0
        %2269 = vmatpush1.bf16.msra.mxu0 %v2255
        %2270 = vmatprep.subr.bf16.mxu0 0
        %2271 = vmatpush1.bf16.msra.mxu0 %v2256
        %2272 = vmatprep.subr.bf16.mxu0 0
        %2273 = vmatpush1.bf16.msra.mxu0 %v2257
        %2274 = vmatprep.subr.bf16.mxu0 0
        %2275 = vmatpush1.bf16.msra.mxu0 0
        %2276 = vmatprep.subr.bf16.mxu0 0
        %2277 = vmatpush1.bf16.msra.mxu0 0
        %2278 = vmatprep.subr.bf16.mxu0 0
        %2279 = vmatpush1.bf16.msra.mxu0 0
        %2280 = vmatprep.subr.bf16.mxu0 0
        %2281 = vmatpush1.bf16.msra.mxu0 0
        %2282 = vmatprep.subr.bf16.mxu0 0
        %2283 = vmatpush1.bf16.msra.mxu0 0
        %2284 = vmatprep.subr.bf16.mxu0 0
        %2285 = vmatpush1.bf16.msra.mxu0 0
        %2286 = vmatprep.subr.bf16.mxu0 0
        %2287 = vmatpush1.bf16.msra.mxu0 0
        %2288 = vmatprep.subr.bf16.mxu0 0
        %2289 = vmatpush1.bf16.msra.mxu0 0
        %2290 = vmatprep.subr.bf16.mxu0 0
        %2291 = vmatpush1.bf16.msra.mxu0 0
        %2292 = vmatprep.subr.bf16.mxu0 0
        %2293 = vmatpush1.bf16.msra.mxu0 0
        %2294 = vmatprep.subr.bf16.mxu0 0
        %2295 = vmatpush1.bf16.msra.mxu0 0
        %2296 = vmatprep.subr.bf16.mxu0 0
        %2297 = vmatpush1.bf16.msra.mxu0 0
        %2298 = vmatprep.mubr.bf16.mxu0 0
        %2299 = vmatmul.mubr.bf16.gmra.mrb[0].mxu0 %v2264
        %v2300 = vpop.f32.mrb[0].mxu0
        %v2301 = vadd.f32 %v2236, %v2300
        %v2302 = vpop.f32.mrb[0].mxu0
        %v2303 = vpop.f32.mrb[0].mxu0
        %v2304 = vadd.f32 %v2236, %v2303
        %v2305 = vpop.f32.mrb[0].mxu0
        %2306 = vdwg.mxu0
        %v2307 = vadd.f32 %v2150, %v2301
        %v2308 = vadd.f32 %v2151, %v2304
        %v2309 = vsel %vm1028, %v2307, 0.0
        %2310 = vadd.xlane.f32.xlu0 %v2309
        %v2311 = vpop.xlane.xlu0 %2310
        %v2312 = vsel %vm1028, %v2308, 0.0
        %2313 = vadd.xlane.f32.xlu0 %v2312
        %v2314 = vpop.xlane.xlu0 %2313
        %v2315 = vmul.f32 %v2311, %v2113
        %v2316 = vmul.f32 %v2314, %v2113
        %v2317 = vsub.f32 %v2307, %v2315
        %v2318 = vsub.f32 %v2308, %v2316
        %v2319 = vmul.f32 %v2317, %v2317
        %v2320 = vmul.f32 %v2318, %v2318
        %v2321 = vsel %vm1028, %v2319, 0.0
        %2322 = vadd.xlane.f32.xlu0 %v2321
        %v2323 = vpop.xlane.xlu0 %2322
        %v2324 = vsel %vm1028, %v2320, 0.0
        %2325 = vadd.xlane.f32.xlu0 %v2324
        %v2326 = vpop.xlane.xlu0 %2325
        %v2327 = vmul.f32 %v2323, %v2113
        %v2328 = vmul.f32 %v2326, %v2113
        %v2329 = vadd.f32 %v2327, 1e-05
        %v2330 = vadd.f32 %v2328, 1e-05
        %v2331 = vrsqrt.pop %v2329
        %v2332 = vrsqrt.pop %v2330
        %v2333 = vmul.f32 %v2317, %v2331
        %v2334 = vmul.f32 %v2318, %v2332
        %v2335 = vld [vmem:[%s835] sm:$0x1]
        %v2337 = vlaneseq
        %v2338 = vshrl.u32 %v2337, 7
        %v2339 = vsub.s32 0, %v2338
        %v2340 = vrot.slane %v2335, %v2339
        %v2342 = vmul.f32 %v2333, %v2340
        %v2343 = vmul.f32 %v2334, %v2340
        %v2344 = vld [vmem:[%s838] sm:$0x1]
        %v2346 = vlaneseq
        %v2347 = vshrl.u32 %v2346, 7
        %v2348 = vsub.s32 0, %v2347
        %v2349 = vrot.slane %v2344, %v2348
        %v2351 = vadd.f32 %v2342, %v2349
        %v2352 = vadd.f32 %v2343, %v2349
        %2353 = vst.msk [vmem:[#allocation13] sm:$0xff] %vm1028, %v2351
        %2354 = vst.msk [vmem:[#allocation13 + $0x8] sm:$0xff] %vm1028, %v2352
        // Predicated region
        $region125: #{tpu_custom_call.1} parent=95 // pred_check
          %p2355 = pneg %p507
        $region126: #{tpu_custom_call.1} parent=95 // pred_check_branch
          %2357 = sbr.rel (%p2355) target = $region128
        $region127: #{tpu_custom_call.1} parent=95 // pred_region
          %s2359 = ssub.s32 256, 256
          %2360 = vsyncadd [#allocation4], %s2359
          %s2361 = sshll.u32 [#allocation13], 4
          %s2362 = int_to_ptr.vmem [resolvable:$true] %s2361
          %2367 = dma.vmem_to_hbm [thread:$0]  %s2362, 256, %s19, [#allocation4], 128, 128, 8
        $region128: #{tpu_custom_call.1} parent=95 // pred_fallthru
          _
        // Predicated region
        $region129: #{tpu_custom_call.1} parent=95 // pred_check
          %p2368 = pneg %p507
        $region130: #{tpu_custom_call.1} parent=95 // pred_check_branch
          %2370 = sbr.rel (%p2368) target = $region132
        $region131: #{tpu_custom_call.1} parent=95 // pred_region
          %2371 = dma.done [#allocation4], 256
        $region132: #{tpu_custom_call.1} parent=95 // pred_fallthru
          _
      $region96: #{tpu_custom_call.1} parent=5 // pred_fallthru
        _
      %p2372 = scmp.le.s32.totalorder 2, %s30
      // Predicated region
      $region133: #{tpu_custom_call.1} parent=5 // pred_check
        %p2373 = pneg %p2372
      $region134: #{tpu_custom_call.1} parent=5 // pred_check_branch
        %2375 = sbr.rel (%p2373) target = $region136
      $region135: #{tpu_custom_call.1} parent=5 // pred_region
        %s2376 = ssub.s32 %s30, 2
      $region136: #{tpu_custom_call.1} parent=5 // pred_fallthru
        _
    $region6: #{tpu_custom_call.1} parent=1 // loop_footer
      %s34 = sadd.s32 1, %s30
    $region7: #{tpu_custom_call.1} parent=1 // loop_footer_branch
      %29 = sbr.rel target = $region3
    $region8: #{tpu_custom_call.1} parent=1 // loop_exit
      _
    %2377 = vsyncpa [#allocation3], 1
    %s2378 = scalar_lea.sflag [#allocation3], 1
    %2379 = vsyncpa %s2378, 1
    %2380 = vsyncpa [#allocation6], 1
    %2381 = vsyncpa [#allocation9], 1
    %2382 = vsyncpa [#allocation12], 1
    %2383 = vsyncpa [#allocation4], 1
    %s2384 = scalar_lea.sflag [#allocation4], 1
    %2385 = vsyncpa %s2384, 1

</llo_original>
